<compile_context>
chip_gen: v5e
topology: v5e:2x2
jax: 0.10.0
libtpu: 0.0.40
codegen_flags: <defaults>
</compile_context>

<pallas_src>
import functools

import jax
import jax.numpy as jnp
from jax import lax
from jax.experimental import pallas as pl
from jax.experimental.pallas import tpu as pltpu


# ----------------------------------------------------------------------------
# Fused Pallas kernel: conv1+bn1+relu -> conv2+bn2 -> (+shortcut) -> relu
# ----------------------------------------------------------------------------
def _basic_block_kernel(*refs, stride, Ho, Wo, PH, cin, planes, has_proj):
    if has_proj:
        (xph_ref, w1_ref, s1_ref, b1_ref, w2_ref, s2_ref, b2_ref,
         wsc_ref, ssc_ref, bsc_ref, o_ref, out1_ref) = refs
    else:
        (xph_ref, w1_ref, s1_ref, b1_ref, w2_ref, s2_ref, b2_ref,
         o_ref, out1_ref) = refs

    M = Ho * Wo

    def x_slab(kh, kw):
        # Tap (kh, kw) of a 3x3 / stride-`stride` conv over the padded input,
        # read from its stride-phase plane: contiguous window, static offsets,
        # no strided loads and no im2col buffer.
        ph = (kh % stride) * stride + (kw % stride)
        r0 = ph * PH + kh // stride
        c0 = kw // stride
        return xph_ref[r0:r0 + Ho, c0:c0 + Wo, :].reshape(M, cin)

    # ---- conv1 (3x3, stride) as 9 shifted bf16 matmuls, f32 accumulate ----
    acc = jnp.dot(x_slab(0, 0), w1_ref[0], preferred_element_type=jnp.float32)
    for t in range(1, 9):
        kh, kw = divmod(t, 3)
        acc = acc + jnp.dot(x_slab(kh, kw), w1_ref[t],
                            preferred_element_type=jnp.float32)
    out1 = jnp.maximum(acc * s1_ref[...] + b1_ref[...], 0.0)   # bn1 + relu (f32)

    # Stash out1 (bf16) in a zero-halo VMEM scratch; conv2 reads shifted windows.
    out1_ref[...] = jnp.zeros_like(out1_ref)
    out1_ref[1:Ho + 1, 1:Wo + 1, :] = (
        out1.reshape(Ho, Wo, planes).astype(jnp.bfloat16))

    # ---- conv2 (3x3, stride 1) as 9 shifted bf16 matmuls, f32 accumulate ----
    acc = jnp.dot(out1_ref[0:Ho, 0:Wo, :].reshape(M, planes), w2_ref[0],
                  preferred_element_type=jnp.float32)
    for t in range(1, 9):
        kh, kw = divmod(t, 3)
        acc = acc + jnp.dot(
            out1_ref[kh:kh + Ho, kw:kw + Wo, :].reshape(M, planes),
            w2_ref[t], preferred_element_type=jnp.float32)
    main = acc * s2_ref[...] + b2_ref[...]                      # bn2 (f32)

    # ---- shortcut: fused 1x1 conv + bn, or plain identity add (VPU) ----
    xs = x_slab(1, 1)                       # == x[::stride, ::stride]
    if has_proj:
        short = (jnp.dot(xs, wsc_ref[...], preferred_element_type=jnp.float32)
                 * ssc_ref[...] + bsc_ref[...])
    else:
        short = xs.astype(jnp.float32)      # cin == planes here

    o_ref[...] = jnp.maximum(main + short, 0.0)


# ----------------------------------------------------------------------------
# pallas_call wrapper
# ----------------------------------------------------------------------------
def _fused_basic_block(xph, w1, s1, b1, w2, s2, b2, shortcut,
                       *, stride, Ho, Wo, PH):
    N, rows, PW, cin = xph.shape
    planes = w1.shape[-1]
    M = Ho * Wo
    has_proj = shortcut is not None

    kernel = functools.partial(_basic_block_kernel, stride=stride, Ho=Ho,
                               Wo=Wo, PH=PH, cin=cin, planes=planes,
                               has_proj=has_proj)

    full2 = lambda n: (0, 0)
    full3 = lambda n: (0, 0, 0)
    in_specs = [
        pl.BlockSpec((None, rows, PW, cin), lambda n: (n, 0, 0, 0)),
        pl.BlockSpec((9, cin, planes), full3),
        pl.BlockSpec((1, planes), full2),
        pl.BlockSpec((1, planes), full2),
        pl.BlockSpec((9, planes, planes), full3),
        pl.BlockSpec((1, planes), full2),
        pl.BlockSpec((1, planes), full2),
    ]
    args = [xph, w1, s1, b1, w2, s2, b2]
    if has_proj:
        wsc, ssc, bsc = shortcut
        in_specs += [pl.BlockSpec((cin, planes), full2),
                     pl.BlockSpec((1, planes), full2),
                     pl.BlockSpec((1, planes), full2)]
        args += [wsc, ssc, bsc]

    return pl.pallas_call(
        kernel,
        out_shape=jax.ShapeDtypeStruct((N, M, planes), jnp.float32),
        grid=(N,),
        in_specs=in_specs,
        out_specs=pl.BlockSpec((None, M, planes), lambda n: (n, 0, 0)),
        scratch_shapes=[pltpu.VMEM((Ho + 2, Wo + 2, planes), jnp.bfloat16)],
        compiler_params=pltpu.CompilerParams(
            dimension_semantics=("parallel",)),
    )(*args)


# ----------------------------------------------------------------------------
# Glue (plain JAX): phase decomposition, BN folding, parameter setup
# ----------------------------------------------------------------------------
def _phase_decompose(x_nhwc, stride, Ho, Wo):
    """Zero-pad (conv padding=1) and split x into stride-phases so every 3x3
    tap becomes a contiguous (Ho, Wo) window at a *static* offset.

    Returns xph of shape (N, stride*stride*PH, PW, C); phase (p, q) occupies
    rows [(p*stride+q)*PH, ...) and holds x_pad[p::stride, q::stride].
    Data inflation is only the +1 halo pad (no 9x im2col blow-up)."""
    N, H, W, C = x_nhwc.shape
    max_off = 2 // stride                      # largest (tap // stride)
    PH, PW = Ho + max_off, Wo + max_off
    Hp, Wp = stride * PH, stride * PW          # >= H + 2 always
    xp = jnp.pad(x_nhwc, ((0, 0), (1, Hp - H - 1), (1, Wp - W - 1), (0, 0)))
    phases = [xp[:, p::stride, q::stride, :]
              for p in range(stride) for q in range(stride)]
    xph = jnp.stack(phases, axis=1)            # (N, s*s, PH, PW, C)
    return xph.reshape(N, stride * stride * PH, PW, C), PH


def fold_bn(gamma, beta, running_mean, running_var, eps=1e-5):
    scale = gamma / jnp.sqrt(running_var + eps)
    bias = beta - running_mean * scale
    return scale, bias


def init_params(key, in_planes, planes, stride):
    ks = jax.random.split(key, 12)
    p = {}
    # conv weights in HWIO layout.
    p["w1"] = 0.1 * jax.random.normal(ks[0], (3, 3, in_planes, planes), jnp.float32)
    p["w2"] = 0.1 * jax.random.normal(ks[1], (3, 3, planes, planes), jnp.float32)
    for i, name in enumerate(["bn1", "bn2"]):
        p[f"{name}_gamma"] = jax.random.uniform(ks[2 + 4 * i], (planes,), jnp.float32, 0.5, 1.5)
        p[f"{name}_beta"] = 0.1 * jax.random.normal(ks[3 + 4 * i], (planes,), jnp.float32)
        p[f"{name}_mean"] = 0.1 * jax.random.normal(ks[4 + 4 * i], (planes,), jnp.float32)
        p[f"{name}_var"] = jax.random.uniform(ks[5 + 4 * i], (planes,), jnp.float32, 0.5, 1.5)
    p["has_proj"] = (stride != 1) or (in_planes != planes)
    if p["has_proj"]:
        p["wsc"] = 0.1 * jax.random.normal(ks[10], (in_planes, planes), jnp.float32)  # 1x1 conv
        p["bnsc_gamma"] = jax.random.uniform(ks[11], (planes,), jnp.float32, 0.5, 1.5)
        p["bnsc_beta"] = jnp.zeros((planes,), jnp.float32)
        p["bnsc_mean"] = jnp.zeros((planes,), jnp.float32)
        p["bnsc_var"] = jnp.ones((planes,), jnp.float32)
    return p


def basic_block_forward(x_nchw, params, stride):
    """Pallas-backed BasicBlock forward.  Input/output NCHW like PyTorch."""
    x = jnp.transpose(x_nchw, (0, 2, 3, 1)).astype(jnp.float32)   # -> NHWC
    N, H, W, cin = x.shape
    planes = params["w1"].shape[-1]
    Ho = (H - 1) // stride + 1
    Wo = (W - 1) // stride + 1

    xph, PH = _phase_decompose(x, stride, Ho, Wo)
    xph = xph.astype(jnp.bfloat16)                                # bf16 MXU input

    s1, b1 = fold_bn(params["bn1_gamma"], params["bn1_beta"],
                     params["bn1_mean"], params["bn1_var"])
    s2, b2 = fold_bn(params["bn2_gamma"], params["bn2_beta"],
                     params["bn2_mean"], params["bn2_var"])

    w1 = params["w1"].reshape(9, cin, planes).astype(jnp.bfloat16)
    w2 = params["w2"].reshape(9, planes, planes).astype(jnp.bfloat16)

    shortcut = None
    if params["has_proj"]:
        ssc, bsc = fold_bn(params["bnsc_gamma"], params["bnsc_beta"],
                           params["bnsc_mean"], params["bnsc_var"])
        shortcut = (params["wsc"].astype(jnp.bfloat16),
                    ssc.reshape(1, -1), bsc.reshape(1, -1))

    out = _fused_basic_block(xph, w1, s1.reshape(1, -1), b1.reshape(1, -1),
                             w2, s2.reshape(1, -1), b2.reshape(1, -1),
                             shortcut, stride=stride, Ho=Ho, Wo=Wo, PH=PH)
    out = out.reshape(N, Ho, Wo, planes)
    return jnp.transpose(out, (0, 3, 1, 2))                       # -> NCHW


# ----------------------------------------------------------------------------
# Pure-JAX reference (lax.conv, f32) for correctness check
# ----------------------------------------------------------------------------
def reference_forward(x_nchw, params, stride):
    x = jnp.transpose(x_nchw, (0, 2, 3, 1)).astype(jnp.float32)
    dn = ("NHWC", "HWIO", "NHWC")
    s1, b1 = fold_bn(params["bn1_gamma"], params["bn1_beta"],
                     params["bn1_mean"], params["bn1_var"])
    s2, b2 = fold_bn(params["bn2_gamma"], params["bn2_beta"],
                     params["bn2_mean"], params["bn2_var"])
    out = lax.conv_general_dilated(x, params["w1"], (stride, stride),
                                   ((1, 1), (1, 1)), dimension_numbers=dn)
    out = jnp.maximum(out * s1 + b1, 0.0)
    out = lax.conv_general_dilated(out, params["w2"], (1, 1),
                                   ((1, 1), (1, 1)), dimension_numbers=dn)
    out = out * s2 + b2
    if params["has_proj"]:
        ssc, bsc = fold_bn(params["bnsc_gamma"], params["bnsc_beta"],
                           params["bnsc_mean"], params["bnsc_var"])
        sc = lax.conv_general_dilated(x, params["wsc"][None, None], (stride, stride),
                                      ((0, 0), (0, 0)), dimension_numbers=dn)
        sc = sc * ssc + bsc
    else:
        sc = x
    out = jnp.maximum(out + sc, 0.0)
    return jnp.transpose(out, (0, 3, 1, 2))


# ----------------------------------------------------------------------------
if __name__ == "__main__":
    key = jax.random.PRNGKey(0)
    k_x, k_p1, k_p2 = jax.random.split(key, 3)

    # Block 1: projection shortcut (stride=2, channel expansion 4 -> 8).
    in_planes, planes, stride = 4, 8, 2
    x = jax.random.normal(k_x, (2, in_planes, 16, 16), jnp.float32)   # NCHW
    params = init_params(k_p1, in_planes, planes, stride)

    out = jax.block_until_ready(basic_block_forward(x, params, stride))
    ref = jax.block_until_ready(reference_forward(x, params, stride))
    assert out.shape == (2, planes, 8, 8), out.shape
    assert jnp.allclose(out, ref, atol=2e-2, rtol=2e-2), \
        float(jnp.max(jnp.abs(out - ref)))

    # Block 2: identity shortcut (stride=1, same channels) — pure VPU add path.
    params2 = init_params(k_p2, planes, planes, 1)
    x2 = ref                                                          # (2, 8, 8, 8)
    out2 = jax.block_until_ready(basic_block_forward(x2, params2, 1))
    ref2 = jax.block_until_ready(reference_forward(x2, params2, 1))
    assert out2.shape == (2, planes, 8, 8), out2.shape
    assert jnp.allclose(out2, ref2, atol=2e-2, rtol=2e-2), \
        float(jnp.max(jnp.abs(out2 - ref2)))

    print("KERNEL_OK")
</pallas_src>

<mosaic_0001>
module attributes {stable_mosaic.version = 11 : i64} {
  func.func @_basic_block_kernel(%arg0: i32, %arg1: memref<1x36x9x4xbf16, #tpu.memory_space<vmem>>, %arg2: memref<9x4x8xbf16, #tpu.memory_space<vmem>>, %arg3: memref<1x8xf32, #tpu.memory_space<vmem>>, %arg4: memref<1x8xf32, #tpu.memory_space<vmem>>, %arg5: memref<9x8x8xbf16, #tpu.memory_space<vmem>>, %arg6: memref<1x8xf32, #tpu.memory_space<vmem>>, %arg7: memref<1x8xf32, #tpu.memory_space<vmem>>, %arg8: memref<4x8xbf16, #tpu.memory_space<vmem>>, %arg9: memref<1x8xf32, #tpu.memory_space<vmem>>, %arg10: memref<1x8xf32, #tpu.memory_space<vmem>>, %arg11: memref<1x64x8xf32, #tpu.memory_space<vmem>>, %arg12: memref<10x10x8xbf16, #tpu.memory_space<vmem>>) attributes {dimension_semantics = [#tpu.dimension_semantics<parallel>], iteration_bounds = array<i64: 2>, scalar_prefetch = 0 : i64, scratch_operands = 1 : i64, tpu.core_type = #tpu.core_type<tc>, window_params = [{transform_indices = @transform_0, window_bounds = array<i64: 1, 36, 9, 4>}, {pipeline_mode = #tpu.pipeline_mode<synchronous>, transform_indices = @transform_1, window_bounds = array<i64: 9, 4, 8>}, {pipeline_mode = #tpu.pipeline_mode<synchronous>, transform_indices = @transform_2, window_bounds = array<i64: 1, 8>}, {pipeline_mode = #tpu.pipeline_mode<synchronous>, transform_indices = @transform_3, window_bounds = array<i64: 1, 8>}, {pipeline_mode = #tpu.pipeline_mode<synchronous>, transform_indices = @transform_4, window_bounds = array<i64: 9, 8, 8>}, {pipeline_mode = #tpu.pipeline_mode<synchronous>, transform_indices = @transform_5, window_bounds = array<i64: 1, 8>}, {pipeline_mode = #tpu.pipeline_mode<synchronous>, transform_indices = @transform_6, window_bounds = array<i64: 1, 8>}, {pipeline_mode = #tpu.pipeline_mode<synchronous>, transform_indices = @transform_7, window_bounds = array<i64: 4, 8>}, {pipeline_mode = #tpu.pipeline_mode<synchronous>, transform_indices = @transform_8, window_bounds = array<i64: 1, 8>}, {pipeline_mode = #tpu.pipeline_mode<synchronous>, transform_indices = @transform_9, window_bounds = array<i64: 1, 8>}, {transform_indices = @transform_10, window_bounds = array<i64: 1, 64, 8>}]} {
    %c0 = arith.constant 0 : index
    %c0_0 = arith.constant 0 : index
    %c0_1 = arith.constant 0 : index
    %c0_2 = arith.constant 0 : index
    %0 = vector.load %arg1[%c0, %c0_0, %c0_1, %c0_2] : memref<1x36x9x4xbf16, #tpu.memory_space<vmem>>, vector<1x8x8x4xbf16>
    %1 = vector.shape_cast %0 : vector<1x8x8x4xbf16> to vector<8x8x4xbf16>
    %2 = vector.shape_cast %1 : vector<8x8x4xbf16> to vector<64x4xbf16>
    %c0_3 = arith.constant 0 : index
    %c0_4 = arith.constant 0 : index
    %c0_5 = arith.constant 0 : index
    %3 = vector.load %arg2[%c0_3, %c0_4, %c0_5] : memref<9x4x8xbf16, #tpu.memory_space<vmem>>, vector<1x4x8xbf16>
    %4 = vector.shape_cast %3 : vector<1x4x8xbf16> to vector<4x8xbf16>
    %cst = arith.constant dense<0.000000e+00> : vector<64x8xf32>
    %5 = tpu.matmul %2, %4, %cst {dimension_numbers = #tpu.dot_dimension_numbers<[1], [0], [0], [1], [0, 0, 1, 1], [], []>} : vector<64x4xbf16>, vector<4x8xbf16>, vector<64x8xf32> -> vector<64x8xf32>
    %c0_6 = arith.constant 0 : index
    %c9 = arith.constant 9 : index
    %c0_7 = arith.constant 0 : index
    %c0_8 = arith.constant 0 : index
    %6 = vector.load %arg1[%c0_6, %c9, %c0_7, %c0_8] : memref<1x36x9x4xbf16, #tpu.memory_space<vmem>>, vector<1x8x8x4xbf16>
    %7 = vector.shape_cast %6 : vector<1x8x8x4xbf16> to vector<8x8x4xbf16>
    %8 = vector.shape_cast %7 : vector<8x8x4xbf16> to vector<64x4xbf16>
    %c1 = arith.constant 1 : index
    %c0_9 = arith.constant 0 : index
    %c0_10 = arith.constant 0 : index
    %9 = vector.load %arg2[%c1, %c0_9, %c0_10] : memref<9x4x8xbf16, #tpu.memory_space<vmem>>, vector<1x4x8xbf16>
    %10 = vector.shape_cast %9 : vector<1x4x8xbf16> to vector<4x8xbf16>
    %cst_11 = arith.constant dense<0.000000e+00> : vector<64x8xf32>
    %11 = tpu.matmul %8, %10, %cst_11 {dimension_numbers = #tpu.dot_dimension_numbers<[1], [0], [0], [1], [0, 0, 1, 1], [], []>} : vector<64x4xbf16>, vector<4x8xbf16>, vector<64x8xf32> -> vector<64x8xf32>
    %12 = arith.addf %5, %11 : vector<64x8xf32>
    %c0_12 = arith.constant 0 : index
    %c0_13 = arith.constant 0 : index
    %c1_14 = arith.constant 1 : index
    %c0_15 = arith.constant 0 : index
    %13 = vector.load %arg1[%c0_12, %c0_13, %c1_14, %c0_15] : memref<1x36x9x4xbf16, #tpu.memory_space<vmem>>, vector<1x8x8x4xbf16>
    %14 = vector.shape_cast %13 : vector<1x8x8x4xbf16> to vector<8x8x4xbf16>
    %15 = vector.shape_cast %14 : vector<8x8x4xbf16> to vector<64x4xbf16>
    %c2 = arith.constant 2 : index
    %c0_16 = arith.constant 0 : index
    %c0_17 = arith.constant 0 : index
    %16 = vector.load %arg2[%c2, %c0_16, %c0_17] : memref<9x4x8xbf16, #tpu.memory_space<vmem>>, vector<1x4x8xbf16>
    %17 = vector.shape_cast %16 : vector<1x4x8xbf16> to vector<4x8xbf16>
    %cst_18 = arith.constant dense<0.000000e+00> : vector<64x8xf32>
    %18 = tpu.matmul %15, %17, %cst_18 {dimension_numbers = #tpu.dot_dimension_numbers<[1], [0], [0], [1], [0, 0, 1, 1], [], []>} : vector<64x4xbf16>, vector<4x8xbf16>, vector<64x8xf32> -> vector<64x8xf32>
    %19 = arith.addf %12, %18 : vector<64x8xf32>
    %c0_19 = arith.constant 0 : index
    %c18 = arith.constant 18 : index
    %c0_20 = arith.constant 0 : index
    %c0_21 = arith.constant 0 : index
    %20 = vector.load %arg1[%c0_19, %c18, %c0_20, %c0_21] : memref<1x36x9x4xbf16, #tpu.memory_space<vmem>>, vector<1x8x8x4xbf16>
    %21 = vector.shape_cast %20 : vector<1x8x8x4xbf16> to vector<8x8x4xbf16>
    %22 = vector.shape_cast %21 : vector<8x8x4xbf16> to vector<64x4xbf16>
    %c3 = arith.constant 3 : index
    %c0_22 = arith.constant 0 : index
    %c0_23 = arith.constant 0 : index
    %23 = vector.load %arg2[%c3, %c0_22, %c0_23] : memref<9x4x8xbf16, #tpu.memory_space<vmem>>, vector<1x4x8xbf16>
    %24 = vector.shape_cast %23 : vector<1x4x8xbf16> to vector<4x8xbf16>
    %cst_24 = arith.constant dense<0.000000e+00> : vector<64x8xf32>
    %25 = tpu.matmul %22, %24, %cst_24 {dimension_numbers = #tpu.dot_dimension_numbers<[1], [0], [0], [1], [0, 0, 1, 1], [], []>} : vector<64x4xbf16>, vector<4x8xbf16>, vector<64x8xf32> -> vector<64x8xf32>
    %26 = arith.addf %19, %25 : vector<64x8xf32>
    %c0_25 = arith.constant 0 : index
    %c27 = arith.constant 27 : index
    %c0_26 = arith.constant 0 : index
    %c0_27 = arith.constant 0 : index
    %27 = vector.load %arg1[%c0_25, %c27, %c0_26, %c0_27] : memref<1x36x9x4xbf16, #tpu.memory_space<vmem>>, vector<1x8x8x4xbf16>
    %28 = vector.shape_cast %27 : vector<1x8x8x4xbf16> to vector<8x8x4xbf16>
    %29 = vector.shape_cast %28 : vector<8x8x4xbf16> to vector<64x4xbf16>
    %c4 = arith.constant 4 : index
    %c0_28 = arith.constant 0 : index
    %c0_29 = arith.constant 0 : index
    %30 = vector.load %arg2[%c4, %c0_28, %c0_29] : memref<9x4x8xbf16, #tpu.memory_space<vmem>>, vector<1x4x8xbf16>
    %31 = vector.shape_cast %30 : vector<1x4x8xbf16> to vector<4x8xbf16>
    %cst_30 = arith.constant dense<0.000000e+00> : vector<64x8xf32>
    %32 = tpu.matmul %29, %31, %cst_30 {dimension_numbers = #tpu.dot_dimension_numbers<[1], [0], [0], [1], [0, 0, 1, 1], [], []>} : vector<64x4xbf16>, vector<4x8xbf16>, vector<64x8xf32> -> vector<64x8xf32>
    %33 = arith.addf %26, %32 : vector<64x8xf32>
    %c0_31 = arith.constant 0 : index
    %c18_32 = arith.constant 18 : index
    %c1_33 = arith.constant 1 : index
    %c0_34 = arith.constant 0 : index
    %34 = vector.load %arg1[%c0_31, %c18_32, %c1_33, %c0_34] : memref<1x36x9x4xbf16, #tpu.memory_space<vmem>>, vector<1x8x8x4xbf16>
    %35 = vector.shape_cast %34 : vector<1x8x8x4xbf16> to vector<8x8x4xbf16>
    %36 = vector.shape_cast %35 : vector<8x8x4xbf16> to vector<64x4xbf16>
    %c5 = arith.constant 5 : index
    %c0_35 = arith.constant 0 : index
    %c0_36 = arith.constant 0 : index
    %37 = vector.load %arg2[%c5, %c0_35, %c0_36] : memref<9x4x8xbf16, #tpu.memory_space<vmem>>, vector<1x4x8xbf16>
    %38 = vector.shape_cast %37 : vector<1x4x8xbf16> to vector<4x8xbf16>
    %cst_37 = arith.constant dense<0.000000e+00> : vector<64x8xf32>
    %39 = tpu.matmul %36, %38, %cst_37 {dimension_numbers = #tpu.dot_dimension_numbers<[1], [0], [0], [1], [0, 0, 1, 1], [], []>} : vector<64x4xbf16>, vector<4x8xbf16>, vector<64x8xf32> -> vector<64x8xf32>
    %40 = arith.addf %33, %39 : vector<64x8xf32>
    %c0_38 = arith.constant 0 : index
    %c1_39 = arith.constant 1 : index
    %c0_40 = arith.constant 0 : index
    %c0_41 = arith.constant 0 : index
    %41 = vector.load %arg1[%c0_38, %c1_39, %c0_40, %c0_41] : memref<1x36x9x4xbf16, #tpu.memory_space<vmem>>, vector<1x8x8x4xbf16>
    %42 = vector.shape_cast %41 : vector<1x8x8x4xbf16> to vector<8x8x4xbf16>
    %43 = vector.shape_cast %42 : vector<8x8x4xbf16> to vector<64x4xbf16>
    %c6 = arith.constant 6 : index
    %c0_42 = arith.constant 0 : index
    %c0_43 = arith.constant 0 : index
    %44 = vector.load %arg2[%c6, %c0_42, %c0_43] : memref<9x4x8xbf16, #tpu.memory_space<vmem>>, vector<1x4x8xbf16>
    %45 = vector.shape_cast %44 : vector<1x4x8xbf16> to vector<4x8xbf16>
    %cst_44 = arith.constant dense<0.000000e+00> : vector<64x8xf32>
    %46 = tpu.matmul %43, %45, %cst_44 {dimension_numbers = #tpu.dot_dimension_numbers<[1], [0], [0], [1], [0, 0, 1, 1], [], []>} : vector<64x4xbf16>, vector<4x8xbf16>, vector<64x8xf32> -> vector<64x8xf32>
    %47 = arith.addf %40, %46 : vector<64x8xf32>
    %c0_45 = arith.constant 0 : index
    %c10 = arith.constant 10 : index
    %c0_46 = arith.constant 0 : index
    %c0_47 = arith.constant 0 : index
    %48 = vector.load %arg1[%c0_45, %c10, %c0_46, %c0_47] : memref<1x36x9x4xbf16, #tpu.memory_space<vmem>>, vector<1x8x8x4xbf16>
    %49 = vector.shape_cast %48 : vector<1x8x8x4xbf16> to vector<8x8x4xbf16>
    %50 = vector.shape_cast %49 : vector<8x8x4xbf16> to vector<64x4xbf16>
    %c7 = arith.constant 7 : index
    %c0_48 = arith.constant 0 : index
    %c0_49 = arith.constant 0 : index
    %51 = vector.load %arg2[%c7, %c0_48, %c0_49] : memref<9x4x8xbf16, #tpu.memory_space<vmem>>, vector<1x4x8xbf16>
    %52 = vector.shape_cast %51 : vector<1x4x8xbf16> to vector<4x8xbf16>
    %cst_50 = arith.constant dense<0.000000e+00> : vector<64x8xf32>
    %53 = tpu.matmul %50, %52, %cst_50 {dimension_numbers = #tpu.dot_dimension_numbers<[1], [0], [0], [1], [0, 0, 1, 1], [], []>} : vector<64x4xbf16>, vector<4x8xbf16>, vector<64x8xf32> -> vector<64x8xf32>
    %54 = arith.addf %47, %53 : vector<64x8xf32>
    %c0_51 = arith.constant 0 : index
    %c1_52 = arith.constant 1 : index
    %c1_53 = arith.constant 1 : index
    %c0_54 = arith.constant 0 : index
    %55 = vector.load %arg1[%c0_51, %c1_52, %c1_53, %c0_54] : memref<1x36x9x4xbf16, #tpu.memory_space<vmem>>, vector<1x8x8x4xbf16>
    %56 = vector.shape_cast %55 : vector<1x8x8x4xbf16> to vector<8x8x4xbf16>
    %57 = vector.shape_cast %56 : vector<8x8x4xbf16> to vector<64x4xbf16>
    %c8 = arith.constant 8 : index
    %c0_55 = arith.constant 0 : index
    %c0_56 = arith.constant 0 : index
    %58 = vector.load %arg2[%c8, %c0_55, %c0_56] : memref<9x4x8xbf16, #tpu.memory_space<vmem>>, vector<1x4x8xbf16>
    %59 = vector.shape_cast %58 : vector<1x4x8xbf16> to vector<4x8xbf16>
    %cst_57 = arith.constant dense<0.000000e+00> : vector<64x8xf32>
    %60 = tpu.matmul %57, %59, %cst_57 {dimension_numbers = #tpu.dot_dimension_numbers<[1], [0], [0], [1], [0, 0, 1, 1], [], []>} : vector<64x4xbf16>, vector<4x8xbf16>, vector<64x8xf32> -> vector<64x8xf32>
    %61 = arith.addf %54, %60 : vector<64x8xf32>
    %c0_58 = arith.constant 0 : index
    %c0_59 = arith.constant 0 : index
    %62 = vector.load %arg3[%c0_58, %c0_59] : memref<1x8xf32, #tpu.memory_space<vmem>>, vector<1x8xf32>
    %63 = vector.broadcast %62 : vector<1x8xf32> to vector<64x8xf32>
    %64 = arith.mulf %61, %63 : vector<64x8xf32>
    %c0_60 = arith.constant 0 : index
    %c0_61 = arith.constant 0 : index
    %65 = vector.load %arg4[%c0_60, %c0_61] : memref<1x8xf32, #tpu.memory_space<vmem>>, vector<1x8xf32>
    %66 = vector.broadcast %65 : vector<1x8xf32> to vector<64x8xf32>
    %67 = arith.addf %64, %66 : vector<64x8xf32>
    %cst_62 = arith.constant 0.000000e+00 : f32
    %68 = vector.broadcast %cst_62 : f32 to vector<64x8xf32>
    %69 = arith.maximumf %67, %68 : vector<64x8xf32>
    %cst_63 = arith.constant 0.000000e+00 : bf16
    %70 = vector.broadcast %cst_63 : bf16 to vector<10x10x8xbf16>
    %c0_64 = arith.constant 0 : index
    %c0_65 = arith.constant 0 : index
    %c0_66 = arith.constant 0 : index
    %71 = vector.load %arg12[%c0_64, %c0_65, %c0_66] : memref<10x10x8xbf16, #tpu.memory_space<vmem>>, vector<10x10x8xbf16>
    tpu.vector_store %arg12[%c0_64, %c0_65, %c0_66], %70 {strides = array<i32>} : memref<10x10x8xbf16, #tpu.memory_space<vmem>>, vector<10x10x8xbf16>,
    %72 = vector.shape_cast %69 : vector<64x8xf32> to vector<8x8x8xf32>
    %73 = arith.truncf %72 : vector<8x8x8xf32> to vector<8x8x8xbf16>
    %c1_67 = arith.constant 1 : index
    %c1_68 = arith.constant 1 : index
    %c0_69 = arith.constant 0 : index
    %74 = vector.load %arg12[%c1_67, %c1_68, %c0_69] : memref<10x10x8xbf16, #tpu.memory_space<vmem>>, vector<8x8x8xbf16>
    tpu.vector_store %arg12[%c1_67, %c1_68, %c0_69], %73 {strides = array<i32>} : memref<10x10x8xbf16, #tpu.memory_space<vmem>>, vector<8x8x8xbf16>,
    %c0_70 = arith.constant 0 : index
    %c0_71 = arith.constant 0 : index
    %c0_72 = arith.constant 0 : index
    %75 = vector.load %arg12[%c0_70, %c0_71, %c0_72] : memref<10x10x8xbf16, #tpu.memory_space<vmem>>, vector<8x8x8xbf16>
    %76 = vector.shape_cast %75 : vector<8x8x8xbf16> to vector<64x8xbf16>
    %c0_73 = arith.constant 0 : index
    %c0_74 = arith.constant 0 : index
    %c0_75 = arith.constant 0 : index
    %77 = vector.load %arg5[%c0_73, %c0_74, %c0_75] : memref<9x8x8xbf16, #tpu.memory_space<vmem>>, vector<1x8x8xbf16>
    %78 = vector.shape_cast %77 : vector<1x8x8xbf16> to vector<8x8xbf16>
    %cst_76 = arith.constant dense<0.000000e+00> : vector<64x8xf32>
    %79 = tpu.matmul %76, %78, %cst_76 {dimension_numbers = #tpu.dot_dimension_numbers<[1], [0], [0], [1], [0, 0, 1, 1], [], []>} : vector<64x8xbf16>, vector<8x8xbf16>, vector<64x8xf32> -> vector<64x8xf32>
    %c0_77 = arith.constant 0 : index
    %c1_78 = arith.constant 1 : index
    %c0_79 = arith.constant 0 : index
    %80 = vector.load %arg12[%c0_77, %c1_78, %c0_79] : memref<10x10x8xbf16, #tpu.memory_space<vmem>>, vector<8x8x8xbf16>
    %81 = vector.shape_cast %80 : vector<8x8x8xbf16> to vector<64x8xbf16>
    %c1_80 = arith.constant 1 : index
    %c0_81 = arith.constant 0 : index
    %c0_82 = arith.constant 0 : index
    %82 = vector.load %arg5[%c1_80, %c0_81, %c0_82] : memref<9x8x8xbf16, #tpu.memory_space<vmem>>, vector<1x8x8xbf16>
    %83 = vector.shape_cast %82 : vector<1x8x8xbf16> to vector<8x8xbf16>
    %cst_83 = arith.constant dense<0.000000e+00> : vector<64x8xf32>
    %84 = tpu.matmul %81, %83, %cst_83 {dimension_numbers = #tpu.dot_dimension_numbers<[1], [0], [0], [1], [0, 0, 1, 1], [], []>} : vector<64x8xbf16>, vector<8x8xbf16>, vector<64x8xf32> -> vector<64x8xf32>
    %85 = arith.addf %79, %84 : vector<64x8xf32>
    %c0_84 = arith.constant 0 : index
    %c2_85 = arith.constant 2 : index
    %c0_86 = arith.constant 0 : index
    %86 = vector.load %arg12[%c0_84, %c2_85, %c0_86] : memref<10x10x8xbf16, #tpu.memory_space<vmem>>, vector<8x8x8xbf16>
    %87 = vector.shape_cast %86 : vector<8x8x8xbf16> to vector<64x8xbf16>
    %c2_87 = arith.constant 2 : index
    %c0_88 = arith.constant 0 : index
    %c0_89 = arith.constant 0 : index
    %88 = vector.load %arg5[%c2_87, %c0_88, %c0_89] : memref<9x8x8xbf16, #tpu.memory_space<vmem>>, vector<1x8x8xbf16>
    %89 = vector.shape_cast %88 : vector<1x8x8xbf16> to vector<8x8xbf16>
    %cst_90 = arith.constant dense<0.000000e+00> : vector<64x8xf32>
    %90 = tpu.matmul %87, %89, %cst_90 {dimension_numbers = #tpu.dot_dimension_numbers<[1], [0], [0], [1], [0, 0, 1, 1], [], []>} : vector<64x8xbf16>, vector<8x8xbf16>, vector<64x8xf32> -> vector<64x8xf32>
    %91 = arith.addf %85, %90 : vector<64x8xf32>
    %c1_91 = arith.constant 1 : index
    %c0_92 = arith.constant 0 : index
    %c0_93 = arith.constant 0 : index
    %92 = vector.load %arg12[%c1_91, %c0_92, %c0_93] : memref<10x10x8xbf16, #tpu.memory_space<vmem>>, vector<8x8x8xbf16>
    %93 = vector.shape_cast %92 : vector<8x8x8xbf16> to vector<64x8xbf16>
    %c3_94 = arith.constant 3 : index
    %c0_95 = arith.constant 0 : index
    %c0_96 = arith.constant 0 : index
    %94 = vector.load %arg5[%c3_94, %c0_95, %c0_96] : memref<9x8x8xbf16, #tpu.memory_space<vmem>>, vector<1x8x8xbf16>
    %95 = vector.shape_cast %94 : vector<1x8x8xbf16> to vector<8x8xbf16>
    %cst_97 = arith.constant dense<0.000000e+00> : vector<64x8xf32>
    %96 = tpu.matmul %93, %95, %cst_97 {dimension_numbers = #tpu.dot_dimension_numbers<[1], [0], [0], [1], [0, 0, 1, 1], [], []>} : vector<64x8xbf16>, vector<8x8xbf16>, vector<64x8xf32> -> vector<64x8xf32>
    %97 = arith.addf %91, %96 : vector<64x8xf32>
    %c1_98 = arith.constant 1 : index
    %c1_99 = arith.constant 1 : index
    %c0_100 = arith.constant 0 : index
    %98 = vector.load %arg12[%c1_98, %c1_99, %c0_100] : memref<10x10x8xbf16, #tpu.memory_space<vmem>>, vector<8x8x8xbf16>
    %99 = vector.shape_cast %98 : vector<8x8x8xbf16> to vector<64x8xbf16>
    %c4_101 = arith.constant 4 : index
    %c0_102 = arith.constant 0 : index
    %c0_103 = arith.constant 0 : index
    %100 = vector.load %arg5[%c4_101, %c0_102, %c0_103] : memref<9x8x8xbf16, #tpu.memory_space<vmem>>, vector<1x8x8xbf16>
    %101 = vector.shape_cast %100 : vector<1x8x8xbf16> to vector<8x8xbf16>
    %cst_104 = arith.constant dense<0.000000e+00> : vector<64x8xf32>
    %102 = tpu.matmul %99, %101, %cst_104 {dimension_numbers = #tpu.dot_dimension_numbers<[1], [0], [0], [1], [0, 0, 1, 1], [], []>} : vector<64x8xbf16>, vector<8x8xbf16>, vector<64x8xf32> -> vector<64x8xf32>
    %103 = arith.addf %97, %102 : vector<64x8xf32>
    %c1_105 = arith.constant 1 : index
    %c2_106 = arith.constant 2 : index
    %c0_107 = arith.constant 0 : index
    %104 = vector.load %arg12[%c1_105, %c2_106, %c0_107] : memref<10x10x8xbf16, #tpu.memory_space<vmem>>, vector<8x8x8xbf16>
    %105 = vector.shape_cast %104 : vector<8x8x8xbf16> to vector<64x8xbf16>
    %c5_108 = arith.constant 5 : index
    %c0_109 = arith.constant 0 : index
    %c0_110 = arith.constant 0 : index
    %106 = vector.load %arg5[%c5_108, %c0_109, %c0_110] : memref<9x8x8xbf16, #tpu.memory_space<vmem>>, vector<1x8x8xbf16>
    %107 = vector.shape_cast %106 : vector<1x8x8xbf16> to vector<8x8xbf16>
    %cst_111 = arith.constant dense<0.000000e+00> : vector<64x8xf32>
    %108 = tpu.matmul %105, %107, %cst_111 {dimension_numbers = #tpu.dot_dimension_numbers<[1], [0], [0], [1], [0, 0, 1, 1], [], []>} : vector<64x8xbf16>, vector<8x8xbf16>, vector<64x8xf32> -> vector<64x8xf32>
    %109 = arith.addf %103, %108 : vector<64x8xf32>
    %c2_112 = arith.constant 2 : index
    %c0_113 = arith.constant 0 : index
    %c0_114 = arith.constant 0 : index
    %110 = vector.load %arg12[%c2_112, %c0_113, %c0_114] : memref<10x10x8xbf16, #tpu.memory_space<vmem>>, vector<8x8x8xbf16>
    %111 = vector.shape_cast %110 : vector<8x8x8xbf16> to vector<64x8xbf16>
    %c6_115 = arith.constant 6 : index
    %c0_116 = arith.constant 0 : index
    %c0_117 = arith.constant 0 : index
    %112 = vector.load %arg5[%c6_115, %c0_116, %c0_117] : memref<9x8x8xbf16, #tpu.memory_space<vmem>>, vector<1x8x8xbf16>
    %113 = vector.shape_cast %112 : vector<1x8x8xbf16> to vector<8x8xbf16>
    %cst_118 = arith.constant dense<0.000000e+00> : vector<64x8xf32>
    %114 = tpu.matmul %111, %113, %cst_118 {dimension_numbers = #tpu.dot_dimension_numbers<[1], [0], [0], [1], [0, 0, 1, 1], [], []>} : vector<64x8xbf16>, vector<8x8xbf16>, vector<64x8xf32> -> vector<64x8xf32>
    %115 = arith.addf %109, %114 : vector<64x8xf32>
    %c2_119 = arith.constant 2 : index
    %c1_120 = arith.constant 1 : index
    %c0_121 = arith.constant 0 : index
    %116 = vector.load %arg12[%c2_119, %c1_120, %c0_121] : memref<10x10x8xbf16, #tpu.memory_space<vmem>>, vector<8x8x8xbf16>
    %117 = vector.shape_cast %116 : vector<8x8x8xbf16> to vector<64x8xbf16>
    %c7_122 = arith.constant 7 : index
    %c0_123 = arith.constant 0 : index
    %c0_124 = arith.constant 0 : index
    %118 = vector.load %arg5[%c7_122, %c0_123, %c0_124] : memref<9x8x8xbf16, #tpu.memory_space<vmem>>, vector<1x8x8xbf16>
    %119 = vector.shape_cast %118 : vector<1x8x8xbf16> to vector<8x8xbf16>
    %cst_125 = arith.constant dense<0.000000e+00> : vector<64x8xf32>
    %120 = tpu.matmul %117, %119, %cst_125 {dimension_numbers = #tpu.dot_dimension_numbers<[1], [0], [0], [1], [0, 0, 1, 1], [], []>} : vector<64x8xbf16>, vector<8x8xbf16>, vector<64x8xf32> -> vector<64x8xf32>
    %121 = arith.addf %115, %120 : vector<64x8xf32>
    %c2_126 = arith.constant 2 : index
    %c2_127 = arith.constant 2 : index
    %c0_128 = arith.constant 0 : index
    %122 = vector.load %arg12[%c2_126, %c2_127, %c0_128] : memref<10x10x8xbf16, #tpu.memory_space<vmem>>, vector<8x8x8xbf16>
    %123 = vector.shape_cast %122 : vector<8x8x8xbf16> to vector<64x8xbf16>
    %c8_129 = arith.constant 8 : index
    %c0_130 = arith.constant 0 : index
    %c0_131 = arith.constant 0 : index
    %124 = vector.load %arg5[%c8_129, %c0_130, %c0_131] : memref<9x8x8xbf16, #tpu.memory_space<vmem>>, vector<1x8x8xbf16>
    %125 = vector.shape_cast %124 : vector<1x8x8xbf16> to vector<8x8xbf16>
    %cst_132 = arith.constant dense<0.000000e+00> : vector<64x8xf32>
    %126 = tpu.matmul %123, %125, %cst_132 {dimension_numbers = #tpu.dot_dimension_numbers<[1], [0], [0], [1], [0, 0, 1, 1], [], []>} : vector<64x8xbf16>, vector<8x8xbf16>, vector<64x8xf32> -> vector<64x8xf32>
    %127 = arith.addf %121, %126 : vector<64x8xf32>
    %c0_133 = arith.constant 0 : index
    %c0_134 = arith.constant 0 : index
    %128 = vector.load %arg6[%c0_133, %c0_134] : memref<1x8xf32, #tpu.memory_space<vmem>>, vector<1x8xf32>
    %129 = vector.broadcast %128 : vector<1x8xf32> to vector<64x8xf32>
    %130 = arith.mulf %127, %129 : vector<64x8xf32>
    %c0_135 = arith.constant 0 : index
    %c0_136 = arith.constant 0 : index
    %131 = vector.load %arg7[%c0_135, %c0_136] : memref<1x8xf32, #tpu.memory_space<vmem>>, vector<1x8xf32>
    %132 = vector.broadcast %131 : vector<1x8xf32> to vector<64x8xf32>
    %133 = arith.addf %130, %132 : vector<64x8xf32>
    %c0_137 = arith.constant 0 : index
    %c27_138 = arith.constant 27 : index
    %c0_139 = arith.constant 0 : index
    %c0_140 = arith.constant 0 : index
    %134 = vector.load %arg1[%c0_137, %c27_138, %c0_139, %c0_140] : memref<1x36x9x4xbf16, #tpu.memory_space<vmem>>, vector<1x8x8x4xbf16>
    %135 = vector.shape_cast %134 : vector<1x8x8x4xbf16> to vector<8x8x4xbf16>
    %136 = vector.shape_cast %135 : vector<8x8x4xbf16> to vector<64x4xbf16>
    %c0_141 = arith.constant 0 : index
    %c0_142 = arith.constant 0 : index
    %137 = vector.load %arg8[%c0_141, %c0_142] : memref<4x8xbf16, #tpu.memory_space<vmem>>, vector<4x8xbf16>
    %cst_143 = arith.constant dense<0.000000e+00> : vector<64x8xf32>
    %138 = tpu.matmul %136, %137, %cst_143 {dimension_numbers = #tpu.dot_dimension_numbers<[1], [0], [0], [1], [0, 0, 1, 1], [], []>} : vector<64x4xbf16>, vector<4x8xbf16>, vector<64x8xf32> -> vector<64x8xf32>
    %c0_144 = arith.constant 0 : index
    %c0_145 = arith.constant 0 : index
    %139 = vector.load %arg9[%c0_144, %c0_145] : memref<1x8xf32, #tpu.memory_space<vmem>>, vector<1x8xf32>
    %140 = vector.broadcast %139 : vector<1x8xf32> to vector<64x8xf32>
    %141 = arith.mulf %138, %140 : vector<64x8xf32>
    %c0_146 = arith.constant 0 : index
    %c0_147 = arith.constant 0 : index
    %142 = vector.load %arg10[%c0_146, %c0_147] : memref<1x8xf32, #tpu.memory_space<vmem>>, vector<1x8xf32>
    %143 = vector.broadcast %142 : vector<1x8xf32> to vector<64x8xf32>
    %144 = arith.addf %141, %143 : vector<64x8xf32>
    %145 = arith.addf %133, %144 : vector<64x8xf32>
    %cst_148 = arith.constant 0.000000e+00 : f32
    %146 = vector.broadcast %cst_148 : f32 to vector<64x8xf32>
    %147 = arith.maximumf %145, %146 : vector<64x8xf32>
    %c0_149 = arith.constant 0 : index
    %c0_150 = arith.constant 0 : index
    %c0_151 = arith.constant 0 : index
    %148 = vector.load %arg11[%c0_149, %c0_150, %c0_151] : memref<1x64x8xf32, #tpu.memory_space<vmem>>, vector<1x64x8xf32>
    %149 = vector.shape_cast %148 : vector<1x64x8xf32> to vector<64x8xf32>
    %150 = vector.shape_cast %147 : vector<64x8xf32> to vector<1x64x8xf32>
    tpu.vector_store %arg11[%c0_149, %c0_150, %c0_151], %150 {strides = array<i32>} : memref<1x64x8xf32, #tpu.memory_space<vmem>>, vector<1x64x8xf32>,
    return
  }
  func.func @transform_0(%arg0: i32) -> (i32, i32, i32, i32) {
    %c0_i32 = arith.constant 0 : i32
    %c0_i32_0 = arith.constant 0 : i32
    %c0_i32_1 = arith.constant 0 : i32
    %c0_i32_2 = arith.constant 0 : i32
    return %arg0, %c0_i32, %c0_i32_0, %c0_i32_1 : i32, i32, i32, i32
  }
  func.func @transform_1(%arg0: i32) -> (i32, i32, i32) {
    %c0_i32 = arith.constant 0 : i32
    %c0_i32_0 = arith.constant 0 : i32
    %c0_i32_1 = arith.constant 0 : i32
    %c0_i32_2 = arith.constant 0 : i32
    return %c0_i32, %c0_i32_0, %c0_i32_1 : i32, i32, i32
  }
  func.func @transform_2(%arg0: i32) -> (i32, i32) {
    %c0_i32 = arith.constant 0 : i32
    %c0_i32_0 = arith.constant 0 : i32
    %c0_i32_1 = arith.constant 0 : i32
    return %c0_i32, %c0_i32_0 : i32, i32
  }
  func.func @transform_3(%arg0: i32) -> (i32, i32) {
    %c0_i32 = arith.constant 0 : i32
    %c0_i32_0 = arith.constant 0 : i32
    %c0_i32_1 = arith.constant 0 : i32
    return %c0_i32, %c0_i32_0 : i32, i32
  }
  func.func @transform_4(%arg0: i32) -> (i32, i32, i32) {
    %c0_i32 = arith.constant 0 : i32
    %c0_i32_0 = arith.constant 0 : i32
    %c0_i32_1 = arith.constant 0 : i32
    %c0_i32_2 = arith.constant 0 : i32
    return %c0_i32, %c0_i32_0, %c0_i32_1 : i32, i32, i32
  }
  func.func @transform_5(%arg0: i32) -> (i32, i32) {
    %c0_i32 = arith.constant 0 : i32
    %c0_i32_0 = arith.constant 0 : i32
    %c0_i32_1 = arith.constant 0 : i32
    return %c0_i32, %c0_i32_0 : i32, i32
  }
  func.func @transform_6(%arg0: i32) -> (i32, i32) {
    %c0_i32 = arith.constant 0 : i32
    %c0_i32_0 = arith.constant 0 : i32
    %c0_i32_1 = arith.constant 0 : i32
    return %c0_i32, %c0_i32_0 : i32, i32
  }
  func.func @transform_7(%arg0: i32) -> (i32, i32) {
    %c0_i32 = arith.constant 0 : i32
    %c0_i32_0 = arith.constant 0 : i32
    %c0_i32_1 = arith.constant 0 : i32
    return %c0_i32, %c0_i32_0 : i32, i32
  }
  func.func @transform_8(%arg0: i32) -> (i32, i32) {
    %c0_i32 = arith.constant 0 : i32
    %c0_i32_0 = arith.constant 0 : i32
    %c0_i32_1 = arith.constant 0 : i32
    return %c0_i32, %c0_i32_0 : i32, i32
  }
  func.func @transform_9(%arg0: i32) -> (i32, i32) {
    %c0_i32 = arith.constant 0 : i32
    %c0_i32_0 = arith.constant 0 : i32
    %c0_i32_1 = arith.constant 0 : i32
    return %c0_i32, %c0_i32_0 : i32, i32
  }
  func.func @transform_10(%arg0: i32) -> (i32, i32, i32) {
    %c0_i32 = arith.constant 0 : i32
    %c0_i32_0 = arith.constant 0 : i32
    %c0_i32_1 = arith.constant 0 : i32
    return %arg0, %c0_i32, %c0_i32_0 : i32, i32, i32
  }
}

</mosaic_0001>

<llo_original>
// kernel: tpu_custom_call.1
$region0: #{tpu_custom_call.1}
  #allocation0 [shape = 'u32[]', space=smem, size = 0x4, offset = 0x4, fixed_abs, tag = 'smem constant byte address 0x4 - core index']
  #allocation1 [shape = 'u32[72,128]{1,0:T(1,128)}', space=vmem, size = 0x9000, scoped, tag = 'internal scratch']
  #allocation2 [shape = 'bf16[10,10,8]{2,1,0:T(8,128)(2,1)}', space=vmem, size = 0xa000, scoped, tag = 'scratch operand']
  %s0 = inlined_call_operand.vmem [shape: bf16[2,36,9,4], index: 0, kind: input, shape index: {}]
  %s1 = inlined_call_operand.vmem [shape: bf16[9,4,8], index: 1, kind: input, shape index: {}]
  %s2 = inlined_call_operand.vmem [shape: f32[1,8], index: 2, kind: input, shape index: {}]
  %s3 = inlined_call_operand.vmem [shape: f32[1,8], index: 3, kind: input, shape index: {}]
  %s4 = inlined_call_operand.vmem [shape: bf16[9,8,8], index: 4, kind: input, shape index: {}]
  %s5 = inlined_call_operand.vmem [shape: f32[1,8], index: 5, kind: input, shape index: {}]
  %s6 = inlined_call_operand.vmem [shape: f32[1,8], index: 6, kind: input, shape index: {}]
  %s7 = inlined_call_operand.vmem [shape: bf16[4,8], index: 7, kind: input, shape index: {}]
  %s8 = inlined_call_operand.vmem [shape: f32[1,8], index: 8, kind: input, shape index: {}]
  %s9 = inlined_call_operand.vmem [shape: f32[1,8], index: 9, kind: input, shape index: {}]
  %s10 = inlined_call_operand.vmem [shape: f32[2,64,8], index: 10, kind: output, shape index: {}]
  %s11 = sld [smem:[#allocation0]]
  $region73: #{tpu_custom_call.1} parent=0
    _
  %s13 = ssub.s32 1, %s11
  %s14 = scalar_select 0, %s13, %s11
  loop: start=0, step=1, limit=4
  $region2: #{tpu_custom_call.1} parent=0 // loop_pre_header
    _
  $region3: #{tpu_custom_call.1} parent=0 // loop_header
    %s16 = sphi 0, %s20
    %p17 = scmp.ge.s32.totalorder %s16, 4
    %s26 = sphi 0, %s28
    %s29 = sphi 0, %s26
    %s30 = sphi 0, %s29
    %s46 = sphi 0, %s30
    %s50 = sphi 0, %s50
    %s52 = sphi 0, %s50
    %s53 = sphi 0, %s52
    %s67 = sphi 0, %s53
    %s71 = sphi 0, %s71
    %s73 = sphi 0, %s71
    %s74 = sphi 0, %s73
    %s88 = sphi 0, %s74
    %s92 = sphi 0, %s92
    %s94 = sphi 0, %s92
    %s95 = sphi 0, %s94
    %s109 = sphi 0, %s95
    %s113 = sphi 0, %s113
    %s115 = sphi 0, %s113
    %s116 = sphi 0, %s115
    %s130 = sphi 0, %s116
    %s134 = sphi 0, %s134
    %s136 = sphi 0, %s134
    %s137 = sphi 0, %s136
    %s151 = sphi 0, %s137
    %s155 = sphi 0, %s155
    %s157 = sphi 0, %s155
    %s158 = sphi 0, %s157
    %s172 = sphi 0, %s158
    %s176 = sphi 0, %s176
    %s178 = sphi 0, %s176
    %s179 = sphi 0, %s178
    %s193 = sphi 0, %s179
    %s197 = sphi 0, %s197
    %s199 = sphi 0, %s197
    %s200 = sphi 0, %s199
    %s214 = sphi 0, %s200
    %s218 = sphi 0, %s218
    %s220 = sphi 0, %s218
    %s221 = sphi 0, %s220
    %s235 = sphi 0, %s221
    %s241 = sphi 0, %s243
    %s244 = sphi 0, %s241
    %s245 = sphi 0, %s244
    %s261 = sphi 0, %s245
  $region4: #{tpu_custom_call.1} parent=0 // loop_header_branch
    %19 = sbr.rel (%p17) target = $region8
  $region5: #{tpu_custom_call.1} parent=0 // loop_body
    %s21 = ssub.s32 %s16, 1
    %s22 = ssub.s32 %s16, 2
    %s23 = sadd.s32 %s16, 1
    %s24 = ssub.s32 %s16, %s23
    %p25 = scmp.eq.s32.totalorder %s24, 0
    %s27 = sadd.s32 %s26, 1
    %s28 = scalar_select %p25, %s26, %s27
    %p31 = pneg %p25
    %p32 = scmp.eq.s32.totalorder %s16, 1
    %p33 = por %p31, %p32
    %p34 = scmp.ne.s32.totalorder %s26, %s29
    %p35 = scmp.eq.s32.totalorder %s16, 0
    %p36 = por %p34, %p35
    %p37 = scmp.ne.s32.totalorder %s26, %s29
    %p38 = scmp.eq.s32.totalorder %s21, 1
    %p39 = por %p37, %p38
    %p40 = scmp.ne.s32.totalorder %s29, %s30
    %p41 = scmp.eq.s32.totalorder %s21, 0
    %p42 = por %p40, %p41
    %p43 = scmp.ne.s32.totalorder %s29, %s30
    %p44 = scmp.eq.s32.totalorder %s22, 1
    %p45 = por %p43, %p44
    %p47 = scmp.ne.s32.totalorder %s30, %s46
    %p48 = scmp.eq.s32.totalorder %s22, 0
    %p49 = por %p47, %p48
    %s51 = sadd.s32 %s50, 1
    %p54 = scmp.eq.s32.totalorder %s16, 1
    %p55 = scmp.ne.s32.totalorder %s50, %s52
    %p56 = scmp.eq.s32.totalorder %s16, 0
    %p57 = por %p55, %p56
    %p58 = scmp.ne.s32.totalorder %s50, %s52
    %p59 = scmp.eq.s32.totalorder %s21, 1
    %p60 = por %p58, %p59
    %p61 = scmp.ne.s32.totalorder %s52, %s53
    %p62 = scmp.eq.s32.totalorder %s21, 0
    %p63 = por %p61, %p62
    %p64 = scmp.ne.s32.totalorder %s52, %s53
    %p65 = scmp.eq.s32.totalorder %s22, 1
    %p66 = por %p64, %p65
    %p68 = scmp.ne.s32.totalorder %s53, %s67
    %p69 = scmp.eq.s32.totalorder %s22, 0
    %p70 = por %p68, %p69
    %s72 = sadd.s32 %s71, 1
    %p75 = scmp.eq.s32.totalorder %s16, 1
    %p76 = scmp.ne.s32.totalorder %s71, %s73
    %p77 = scmp.eq.s32.totalorder %s16, 0
    %p78 = por %p76, %p77
    %p79 = scmp.ne.s32.totalorder %s71, %s73
    %p80 = scmp.eq.s32.totalorder %s21, 1
    %p81 = por %p79, %p80
    %p82 = scmp.ne.s32.totalorder %s73, %s74
    %p83 = scmp.eq.s32.totalorder %s21, 0
    %p84 = por %p82, %p83
    %p85 = scmp.ne.s32.totalorder %s73, %s74
    %p86 = scmp.eq.s32.totalorder %s22, 1
    %p87 = por %p85, %p86
    %p89 = scmp.ne.s32.totalorder %s74, %s88
    %p90 = scmp.eq.s32.totalorder %s22, 0
    %p91 = por %p89, %p90
    %s93 = sadd.s32 %s92, 1
    %p96 = scmp.eq.s32.totalorder %s16, 1
    %p97 = scmp.ne.s32.totalorder %s92, %s94
    %p98 = scmp.eq.s32.totalorder %s16, 0
    %p99 = por %p97, %p98
    %p100 = scmp.ne.s32.totalorder %s92, %s94
    %p101 = scmp.eq.s32.totalorder %s21, 1
    %p102 = por %p100, %p101
    %p103 = scmp.ne.s32.totalorder %s94, %s95
    %p104 = scmp.eq.s32.totalorder %s21, 0
    %p105 = por %p103, %p104
    %p106 = scmp.ne.s32.totalorder %s94, %s95
    %p107 = scmp.eq.s32.totalorder %s22, 1
    %p108 = por %p106, %p107
    %p110 = scmp.ne.s32.totalorder %s95, %s109
    %p111 = scmp.eq.s32.totalorder %s22, 0
    %p112 = por %p110, %p111
    %s114 = sadd.s32 %s113, 1
    %p117 = scmp.eq.s32.totalorder %s16, 1
    %p118 = scmp.ne.s32.totalorder %s113, %s115
    %p119 = scmp.eq.s32.totalorder %s16, 0
    %p120 = por %p118, %p119
    %p121 = scmp.ne.s32.totalorder %s113, %s115
    %p122 = scmp.eq.s32.totalorder %s21, 1
    %p123 = por %p121, %p122
    %p124 = scmp.ne.s32.totalorder %s115, %s116
    %p125 = scmp.eq.s32.totalorder %s21, 0
    %p126 = por %p124, %p125
    %p127 = scmp.ne.s32.totalorder %s115, %s116
    %p128 = scmp.eq.s32.totalorder %s22, 1
    %p129 = por %p127, %p128
    %p131 = scmp.ne.s32.totalorder %s116, %s130
    %p132 = scmp.eq.s32.totalorder %s22, 0
    %p133 = por %p131, %p132
    %s135 = sadd.s32 %s134, 1
    %p138 = scmp.eq.s32.totalorder %s16, 1
    %p139 = scmp.ne.s32.totalorder %s134, %s136
    %p140 = scmp.eq.s32.totalorder %s16, 0
    %p141 = por %p139, %p140
    %p142 = scmp.ne.s32.totalorder %s134, %s136
    %p143 = scmp.eq.s32.totalorder %s21, 1
    %p144 = por %p142, %p143
    %p145 = scmp.ne.s32.totalorder %s136, %s137
    %p146 = scmp.eq.s32.totalorder %s21, 0
    %p147 = por %p145, %p146
    %p148 = scmp.ne.s32.totalorder %s136, %s137
    %p149 = scmp.eq.s32.totalorder %s22, 1
    %p150 = por %p148, %p149
    %p152 = scmp.ne.s32.totalorder %s137, %s151
    %p153 = scmp.eq.s32.totalorder %s22, 0
    %p154 = por %p152, %p153
    %s156 = sadd.s32 %s155, 1
    %p159 = scmp.eq.s32.totalorder %s16, 1
    %p160 = scmp.ne.s32.totalorder %s155, %s157
    %p161 = scmp.eq.s32.totalorder %s16, 0
    %p162 = por %p160, %p161
    %p163 = scmp.ne.s32.totalorder %s155, %s157
    %p164 = scmp.eq.s32.totalorder %s21, 1
    %p165 = por %p163, %p164
    %p166 = scmp.ne.s32.totalorder %s157, %s158
    %p167 = scmp.eq.s32.totalorder %s21, 0
    %p168 = por %p166, %p167
    %p169 = scmp.ne.s32.totalorder %s157, %s158
    %p170 = scmp.eq.s32.totalorder %s22, 1
    %p171 = por %p169, %p170
    %p173 = scmp.ne.s32.totalorder %s158, %s172
    %p174 = scmp.eq.s32.totalorder %s22, 0
    %p175 = por %p173, %p174
    %s177 = sadd.s32 %s176, 1
    %p180 = scmp.eq.s32.totalorder %s16, 1
    %p181 = scmp.ne.s32.totalorder %s176, %s178
    %p182 = scmp.eq.s32.totalorder %s16, 0
    %p183 = por %p181, %p182
    %p184 = scmp.ne.s32.totalorder %s176, %s178
    %p185 = scmp.eq.s32.totalorder %s21, 1
    %p186 = por %p184, %p185
    %p187 = scmp.ne.s32.totalorder %s178, %s179
    %p188 = scmp.eq.s32.totalorder %s21, 0
    %p189 = por %p187, %p188
    %p190 = scmp.ne.s32.totalorder %s178, %s179
    %p191 = scmp.eq.s32.totalorder %s22, 1
    %p192 = por %p190, %p191
    %p194 = scmp.ne.s32.totalorder %s179, %s193
    %p195 = scmp.eq.s32.totalorder %s22, 0
    %p196 = por %p194, %p195
    %s198 = sadd.s32 %s197, 1
    %p201 = scmp.eq.s32.totalorder %s16, 1
    %p202 = scmp.ne.s32.totalorder %s197, %s199
    %p203 = scmp.eq.s32.totalorder %s16, 0
    %p204 = por %p202, %p203
    %p205 = scmp.ne.s32.totalorder %s197, %s199
    %p206 = scmp.eq.s32.totalorder %s21, 1
    %p207 = por %p205, %p206
    %p208 = scmp.ne.s32.totalorder %s199, %s200
    %p209 = scmp.eq.s32.totalorder %s21, 0
    %p210 = por %p208, %p209
    %p211 = scmp.ne.s32.totalorder %s199, %s200
    %p212 = scmp.eq.s32.totalorder %s22, 1
    %p213 = por %p211, %p212
    %p215 = scmp.ne.s32.totalorder %s200, %s214
    %p216 = scmp.eq.s32.totalorder %s22, 0
    %p217 = por %p215, %p216
    %s219 = sadd.s32 %s218, 1
    %p222 = scmp.eq.s32.totalorder %s16, 1
    %p223 = scmp.ne.s32.totalorder %s218, %s220
    %p224 = scmp.eq.s32.totalorder %s16, 0
    %p225 = por %p223, %p224
    %p226 = scmp.ne.s32.totalorder %s218, %s220
    %p227 = scmp.eq.s32.totalorder %s21, 1
    %p228 = por %p226, %p227
    %p229 = scmp.ne.s32.totalorder %s220, %s221
    %p230 = scmp.eq.s32.totalorder %s21, 0
    %p231 = por %p229, %p230
    %p232 = scmp.ne.s32.totalorder %s220, %s221
    %p233 = scmp.eq.s32.totalorder %s22, 1
    %p234 = por %p232, %p233
    %p236 = scmp.ne.s32.totalorder %s221, %s235
    %p237 = scmp.eq.s32.totalorder %s22, 0
    %p238 = por %p236, %p237
    %s239 = ssub.s32 %s16, %s23
    %p240 = scmp.eq.s32.totalorder %s239, 0
    %s242 = sadd.s32 %s241, 1
    %s243 = scalar_select %p240, %s241, %s242
    %p246 = pneg %p240
    %p247 = scmp.eq.s32.totalorder %s16, 1
    %p248 = por %p246, %p247
    %p249 = scmp.ne.s32.totalorder %s241, %s244
    %p250 = scmp.eq.s32.totalorder %s16, 0
    %p251 = por %p249, %p250
    %p252 = scmp.ne.s32.totalorder %s241, %s244
    %p253 = scmp.eq.s32.totalorder %s21, 1
    %p254 = por %p252, %p253
    %p255 = scmp.ne.s32.totalorder %s244, %s245
    %p256 = scmp.eq.s32.totalorder %s21, 0
    %p257 = por %p255, %p256
    %p258 = scmp.ne.s32.totalorder %s244, %s245
    %p259 = scmp.eq.s32.totalorder %s22, 1
    %p260 = por %p258, %p259
    %p262 = scmp.ne.s32.totalorder %s245, %s261
    %p263 = scmp.eq.s32.totalorder %s22, 0
    %p264 = por %p262, %p263
    %p265 = scmp.le.s32.totalorder 1, %s16
    %p266 = scmp.lt.s32.totalorder %s16, 3
    %p267 = pnand %p265, %p266
    %p268 = pneg %p267
    // Predicated region
    $region9: #{tpu_custom_call.1} parent=5 // pred_check
      _
    $region10: #{tpu_custom_call.1} parent=5 // pred_check_branch
      %270 = sbr.rel (%p267) target = $region12
    $region11: #{tpu_custom_call.1} parent=5 // pred_region
      %s271 = ssub.s32 %s16, 1
      // Predicated region
      $region13: #{tpu_custom_call.1} parent=11 // pred_check
        %p272 = pneg %p63
      $region14: #{tpu_custom_call.1} parent=11 // pred_check_branch
        %274 = sbr.rel (%p272) target = $region16
      $region15: #{tpu_custom_call.1} parent=11 // pred_region
        _
      $region16: #{tpu_custom_call.1} parent=11 // pred_fallthru
        _
      // Predicated region
      $region17: #{tpu_custom_call.1} parent=11 // pred_check
        %p275 = pneg %p84
      $region18: #{tpu_custom_call.1} parent=11 // pred_check_branch
        %277 = sbr.rel (%p275) target = $region20
      $region19: #{tpu_custom_call.1} parent=11 // pred_region
        _
      $region20: #{tpu_custom_call.1} parent=11 // pred_fallthru
        _
      // Predicated region
      $region21: #{tpu_custom_call.1} parent=11 // pred_check
        %p278 = pneg %p105
      $region22: #{tpu_custom_call.1} parent=11 // pred_check_branch
        %280 = sbr.rel (%p278) target = $region24
      $region23: #{tpu_custom_call.1} parent=11 // pred_region
        _
      $region24: #{tpu_custom_call.1} parent=11 // pred_fallthru
        _
      // Predicated region
      $region25: #{tpu_custom_call.1} parent=11 // pred_check
        %p281 = pneg %p126
      $region26: #{tpu_custom_call.1} parent=11 // pred_check_branch
        %283 = sbr.rel (%p281) target = $region28
      $region27: #{tpu_custom_call.1} parent=11 // pred_region
        _
      $region28: #{tpu_custom_call.1} parent=11 // pred_fallthru
        _
      // Predicated region
      $region29: #{tpu_custom_call.1} parent=11 // pred_check
        %p284 = pneg %p147
      $region30: #{tpu_custom_call.1} parent=11 // pred_check_branch
        %286 = sbr.rel (%p284) target = $region32
      $region31: #{tpu_custom_call.1} parent=11 // pred_region
        _
      $region32: #{tpu_custom_call.1} parent=11 // pred_fallthru
        _
      // Predicated region
      $region33: #{tpu_custom_call.1} parent=11 // pred_check
        %p287 = pneg %p168
      $region34: #{tpu_custom_call.1} parent=11 // pred_check_branch
        %289 = sbr.rel (%p287) target = $region36
      $region35: #{tpu_custom_call.1} parent=11 // pred_region
        _
      $region36: #{tpu_custom_call.1} parent=11 // pred_fallthru
        _
      // Predicated region
      $region37: #{tpu_custom_call.1} parent=11 // pred_check
        %p290 = pneg %p189
      $region38: #{tpu_custom_call.1} parent=11 // pred_check_branch
        %292 = sbr.rel (%p290) target = $region40
      $region39: #{tpu_custom_call.1} parent=11 // pred_region
        _
      $region40: #{tpu_custom_call.1} parent=11 // pred_fallthru
        _
      // Predicated region
      $region41: #{tpu_custom_call.1} parent=11 // pred_check
        %p293 = pneg %p210
      $region42: #{tpu_custom_call.1} parent=11 // pred_check_branch
        %295 = sbr.rel (%p293) target = $region44
      $region43: #{tpu_custom_call.1} parent=11 // pred_region
        _
      $region44: #{tpu_custom_call.1} parent=11 // pred_fallthru
        _
      // Predicated region
      $region45: #{tpu_custom_call.1} parent=11 // pred_check
        %p296 = pneg %p231
      $region46: #{tpu_custom_call.1} parent=11 // pred_check_branch
        %298 = sbr.rel (%p296) target = $region48
      $region47: #{tpu_custom_call.1} parent=11 // pred_region
        _
      $region48: #{tpu_custom_call.1} parent=11 // pred_fallthru
        _
    $region12: #{tpu_custom_call.1} parent=5 // pred_fallthru
      _
    %p299 = scmp.lt.s32.totalorder %s16, 2
    // Predicated region
    $region49: #{tpu_custom_call.1} parent=5 // pred_check
      %p300 = pneg %p299
    $region50: #{tpu_custom_call.1} parent=5 // pred_check_branch
      %302 = sbr.rel (%p300) target = $region52
    $region51: #{tpu_custom_call.1} parent=5 // pred_region
      // Predicated region
      $region53: #{tpu_custom_call.1} parent=51 // pred_check
        %p303 = pneg %p36
      $region54: #{tpu_custom_call.1} parent=51 // pred_check_branch
        %305 = sbr.rel (%p303) target = $region56
      $region55: #{tpu_custom_call.1} parent=51 // pred_region
        %p306 = scmp.lt.s32.totalorder %s16, 1
        %s307 = scalar_select %p306, %s16, 1
        %s308 = smul.addr %s307, 72
        %s309 = smul.addr %s308, 4
        %s310 = scalar_lea.vmem %s0, %s309
      $region56: #{tpu_custom_call.1} parent=51 // pred_fallthru
        _
    $region52: #{tpu_custom_call.1} parent=5 // pred_fallthru
      _
    %p311 = scmp.le.s32.totalorder 1, %s16
    %p312 = scmp.lt.s32.totalorder %s16, 3
    %p313 = pnand %p311, %p312
    %p314 = pneg %p313
    // Predicated region
    $region57: #{tpu_custom_call.1} parent=5 // pred_check
      _
    $region58: #{tpu_custom_call.1} parent=5 // pred_check_branch
      %316 = sbr.rel (%p313) target = $region60
    $region59: #{tpu_custom_call.1} parent=5 // pred_region
      %s317 = ssub.s32 %s16, 1
      %p318 = scmp.lt.s32.totalorder %s21, 1
      %s319 = scalar_select %p318, %s21, 1
      %s320 = smul.addr %s319, 72
      %s321 = smul.addr %s320, 4
      %s322 = scalar_lea.vmem %s0, %s321
      %p323 = pneg %p42
      %p324 = pneg %p39
      %p325 = pneg %p63
      %p326 = pneg %p60
      %p327 = pneg %p84
      %p328 = pneg %p81
      %p329 = pneg %p105
      %p330 = pneg %p102
      %p331 = pneg %p126
      %p332 = pneg %p123
      %p333 = pneg %p147
      %p334 = pneg %p144
      %p335 = pneg %p168
      %p336 = pneg %p165
      %p337 = pneg %p189
      %p338 = pneg %p186
      %p339 = pneg %p210
      %p340 = pneg %p207
      %p341 = pneg %p231
      %p342 = pneg %p228
      %p343 = pneg %p257
      %p344 = pneg %p254
      %p345 = scmp.lt.s32.totalorder %s21, 1
      %s346 = scalar_select %p345, %s21, 1
      %s347 = smul.addr %s346, 8
      %s348 = smul.addr %s347, 8
      %s349 = scalar_lea.vmem %s10, %s348
      %p350 = scmp.lt.s32.totalorder %s21, 1
      %s351 = scalar_select %p350, %s21, 1
      %s352 = smul.addr %s351, 72
      %s353 = smul.addr %s352, 4
      %s354 = scalar_lea.vmem %s0, %s353
      %p355 = scmp.lt.s32.totalorder %s21, 1
      %s356 = scalar_select %p355, %s21, 1
      %s357 = smul.addr %s356, 8
      %s358 = smul.addr %s357, 8
      %s359 = scalar_lea.vmem %s10, %s358
      %v361 = vld [vmem:[%s354] sm:$0xf]
      %v362 = vld [vmem:[%s354 + $0x8] sm:$0xf]
      %v363 = vld [vmem:[%s354 + $0x10] sm:$0xf]
      %v364 = vld [vmem:[%s354 + $0x18] sm:$0xf]
      %v365 = vld [vmem:[%s354 + $0x20] sm:$0xf]
      %v366 = vld [vmem:[%s354 + $0x28] sm:$0xf]
      %v367 = vld [vmem:[%s354 + $0x30] sm:$0xf]
      %v368 = vld [vmem:[%s354 + $0x38] sm:$0xf]
      %v369 = vld [vmem:[%s1] sm:$0x3]
      %s370 = scalar_lea.vmem %s354, 72
      %v371 = vld [vmem:[%s370] sm:$0xf]
      %v372 = vld [vmem:[%s370 + $0x8] sm:$0xf]
      %v373 = vld [vmem:[%s370 + $0x10] sm:$0xf]
      %v374 = vld [vmem:[%s370 + $0x18] sm:$0xf]
      %v375 = vld [vmem:[%s370 + $0x20] sm:$0xf]
      %v376 = vld [vmem:[%s370 + $0x28] sm:$0xf]
      %v377 = vld [vmem:[%s370 + $0x30] sm:$0xf]
      %v378 = vld [vmem:[%s370 + $0x38] sm:$0xf]
      %s379 = scalar_lea.vmem %s1, 2
      %v380 = vld [vmem:[%s379] sm:$0x3]
      %v389 = vunpack.c.l.b16 %v371
      %v390 = vunpack.c.l.b16 %v372
      %v391 = vunpack.c.l.b16 %v373
      %v392 = vunpack.c.l.b16 %v374
      %v393 = vunpack.c.l.b16 %v375
      %v394 = vunpack.c.l.b16 %v376
      %v395 = vunpack.c.l.b16 %v377
      %v396 = vunpack.c.l.b16 %v378
      %v397 = vpack.c.b16 %v390, %v389
      %v398 = vpack.c.b16 %v392, %v391
      %v399 = vpack.c.b16 %v394, %v393
      %v400 = vpack.c.b16 %v396, %v395
      %vm401 = vcmask 31744
      %v403 = vsel %vm401, %v397, 0
      %v406 = vsel %vm401, %v398, 0
      %v409 = vsel %vm401, %v399, 0
      %v412 = vsel %vm401, %v400, 0
      %vm414 = vcmask 1041408
      %v416 = vsel %vm414, %v380, 0
      %418 = vmatpush.bf16.msra.mxu0 0
      %419 = vmatpush.bf16.msra.mxu0 0
      %420 = vmatpush.bf16.msra.mxu0 0
      %421 = vmatpush.bf16.msra.mxu0 0
      %422 = vmatpush.bf16.msra.mxu0 0
      %423 = vmatpush.bf16.msra.mxu0 0
      %424 = vmatpush.bf16.msra.mxu0 0
      %425 = vmatpush.bf16.msra.mxu0 %v416
      %426 = vmatmul.bf16.gmra.mxu0 %v403
      %v427 = vpop.f32.mrf.mxu0
      %v428 = vadd.f32 0.0, %v427
      %v429 = vpop.f32.mrf.mxu0
      %v430 = vadd.f32 0.0, %v429
      %431 = vmatmul.bf16.gmra.mxu0 %v406
      %v432 = vpop.f32.mrf.mxu0
      %v433 = vadd.f32 0.0, %v432
      %v434 = vpop.f32.mrf.mxu0
      %v435 = vadd.f32 0.0, %v434
      %436 = vmatmul.bf16.gmra.mxu0 %v409
      %v437 = vpop.f32.mrf.mxu0
      %v438 = vadd.f32 0.0, %v437
      %v439 = vpop.f32.mrf.mxu0
      %v440 = vadd.f32 0.0, %v439
      %441 = vmatmul.bf16.gmra.mxu0 %v412
      %v442 = vpop.f32.mrf.mxu0
      %v443 = vadd.f32 0.0, %v442
      %v444 = vpop.f32.mrf.mxu0
      %v445 = vadd.f32 0.0, %v444
      %446 = vdwg.mxu0
      %v455 = vunpack.c.l.b16 %v361
      %v456 = vunpack.c.l.b16 %v362
      %v457 = vunpack.c.l.b16 %v363
      %v458 = vunpack.c.l.b16 %v364
      %v459 = vunpack.c.l.b16 %v365
      %v460 = vunpack.c.l.b16 %v366
      %v461 = vunpack.c.l.b16 %v367
      %v462 = vunpack.c.l.b16 %v368
      %v463 = vpack.c.b16 %v456, %v455
      %v464 = vpack.c.b16 %v458, %v457
      %v465 = vpack.c.b16 %v460, %v459
      %v466 = vpack.c.b16 %v462, %v461
      %v468 = vsel %vm401, %v463, 0
      %v471 = vsel %vm401, %v464, 0
      %v474 = vsel %vm401, %v465, 0
      %v477 = vsel %vm401, %v466, 0
      %v480 = vsel %vm414, %v369, 0
      %482 = vmatpush.bf16.msra.mxu0 0
      %483 = vmatpush.bf16.msra.mxu0 0
      %484 = vmatpush.bf16.msra.mxu0 0
      %485 = vmatpush.bf16.msra.mxu0 0
      %486 = vmatpush.bf16.msra.mxu0 0
      %487 = vmatpush.bf16.msra.mxu0 0
      %488 = vmatpush.bf16.msra.mxu0 0
      %489 = vmatpush.bf16.msra.mxu0 %v480
      %490 = vmatmul.bf16.gmra.mxu0 %v468
      %v491 = vpop.f32.mrf.mxu0
      %v492 = vadd.f32 %v428, %v491
      %v493 = vpop.f32.mrf.mxu0
      %v494 = vadd.f32 %v430, %v493
      %495 = vmatmul.bf16.gmra.mxu0 %v471
      %v496 = vpop.f32.mrf.mxu0
      %v497 = vadd.f32 %v433, %v496
      %v498 = vpop.f32.mrf.mxu0
      %v499 = vadd.f32 %v435, %v498
      %500 = vmatmul.bf16.gmra.mxu0 %v474
      %v501 = vpop.f32.mrf.mxu0
      %v502 = vadd.f32 %v438, %v501
      %v503 = vpop.f32.mrf.mxu0
      %v504 = vadd.f32 %v440, %v503
      %505 = vmatmul.bf16.gmra.mxu0 %v477
      %v506 = vpop.f32.mrf.mxu0
      %v507 = vadd.f32 %v443, %v506
      %v508 = vpop.f32.mrf.mxu0
      %v509 = vadd.f32 %v445, %v508
      %510 = vdwg.mxu0
      %v511 = vld [vmem:[%s354] sm:$0xf]
      %v512 = vld [vmem:[%s354 + $0x4] sm:$0x1]
      %v513 = vld [vmem:[%s354 + $0x8] sm:$0xf]
      %v514 = vld [vmem:[%s354 + $0xc] sm:$0x1]
      %v515 = vld [vmem:[%s354 + $0x10] sm:$0xf]
      %v516 = vld [vmem:[%s354 + $0x14] sm:$0x1]
      %v517 = vld [vmem:[%s354 + $0x18] sm:$0xf]
      %v518 = vld [vmem:[%s354 + $0x1c] sm:$0x1]
      %v519 = vld [vmem:[%s354 + $0x20] sm:$0xf]
      %v520 = vld [vmem:[%s354 + $0x24] sm:$0x1]
      %v521 = vld [vmem:[%s354 + $0x28] sm:$0xf]
      %v522 = vld [vmem:[%s354 + $0x2c] sm:$0x1]
      %v523 = vld [vmem:[%s354 + $0x30] sm:$0xf]
      %v524 = vld [vmem:[%s354 + $0x34] sm:$0x1]
      %v525 = vld [vmem:[%s354 + $0x38] sm:$0xf]
      %v526 = vld [vmem:[%s354 + $0x3c] sm:$0x1]
      %vm527 = vsmask.f32 3328
      %vm528 = vsmask.f32 7440
      %vm529 = vmor %vm527, %vm528
      %v531 = vshrl.u32 %v511, 16
      %v533 = vrot.slane %v531, 4
      %v534 = vshll.u32 %v511, 16
      %v536 = vrot.slane %v534, 5
      %v537 = vor.u32 %v533, %v536
      %v538 = vrot.slane %v537, 4
      %v540 = vshll.u32 %v512, 16
      %v542 = vrot.slane %v540, 5
      %v543 = vsel %vm529, %v538, %v542
      %v545 = vshrl.u32 %v513, 16
      %v547 = vrot.slane %v545, 4
      %v548 = vshll.u32 %v513, 16
      %v550 = vrot.slane %v548, 5
      %v551 = vor.u32 %v547, %v550
      %v552 = vrot.slane %v551, 4
      %v554 = vshll.u32 %v514, 16
      %v556 = vrot.slane %v554, 5
      %v557 = vsel %vm529, %v552, %v556
      %v559 = vshrl.u32 %v515, 16
      %v561 = vrot.slane %v559, 4
      %v562 = vshll.u32 %v515, 16
      %v564 = vrot.slane %v562, 5
      %v565 = vor.u32 %v561, %v564
      %v566 = vrot.slane %v565, 4
      %v568 = vshll.u32 %v516, 16
      %v570 = vrot.slane %v568, 5
      %v571 = vsel %vm529, %v566, %v570
      %v573 = vshrl.u32 %v517, 16
      %v575 = vrot.slane %v573, 4
      %v576 = vshll.u32 %v517, 16
      %v578 = vrot.slane %v576, 5
      %v579 = vor.u32 %v575, %v578
      %v580 = vrot.slane %v579, 4
      %v582 = vshll.u32 %v518, 16
      %v584 = vrot.slane %v582, 5
      %v585 = vsel %vm529, %v580, %v584
      %v587 = vshrl.u32 %v519, 16
      %v589 = vrot.slane %v587, 4
      %v590 = vshll.u32 %v519, 16
      %v592 = vrot.slane %v590, 5
      %v593 = vor.u32 %v589, %v592
      %v594 = vrot.slane %v593, 4
      %v596 = vshll.u32 %v520, 16
      %v598 = vrot.slane %v596, 5
      %v599 = vsel %vm529, %v594, %v598
      %v601 = vshrl.u32 %v521, 16
      %v603 = vrot.slane %v601, 4
      %v604 = vshll.u32 %v521, 16
      %v606 = vrot.slane %v604, 5
      %v607 = vor.u32 %v603, %v606
      %v608 = vrot.slane %v607, 4
      %v610 = vshll.u32 %v522, 16
      %v612 = vrot.slane %v610, 5
      %v613 = vsel %vm529, %v608, %v612
      %v615 = vshrl.u32 %v523, 16
      %v617 = vrot.slane %v615, 4
      %v618 = vshll.u32 %v523, 16
      %v620 = vrot.slane %v618, 5
      %v621 = vor.u32 %v617, %v620
      %v622 = vrot.slane %v621, 4
      %v624 = vshll.u32 %v524, 16
      %v626 = vrot.slane %v624, 5
      %v627 = vsel %vm529, %v622, %v626
      %v629 = vshrl.u32 %v525, 16
      %v631 = vrot.slane %v629, 4
      %v632 = vshll.u32 %v525, 16
      %v634 = vrot.slane %v632, 5
      %v635 = vor.u32 %v631, %v634
      %v636 = vrot.slane %v635, 4
      %v638 = vshll.u32 %v526, 16
      %v640 = vrot.slane %v638, 5
      %v641 = vsel %vm529, %v636, %v640
      %s642 = scalar_lea.vmem %s1, 4
      %v643 = vld [vmem:[%s642] sm:$0x3]
      %v644 = vunpack.c.l.b16 %v543
      %v645 = vunpack.c.l.b16 %v557
      %v646 = vunpack.c.l.b16 %v571
      %v647 = vunpack.c.l.b16 %v585
      %v648 = vunpack.c.l.b16 %v599
      %v649 = vunpack.c.l.b16 %v613
      %v650 = vunpack.c.l.b16 %v627
      %v651 = vunpack.c.l.b16 %v641
      %v652 = vpack.c.b16 %v645, %v644
      %v653 = vpack.c.b16 %v647, %v646
      %v654 = vpack.c.b16 %v649, %v648
      %v655 = vpack.c.b16 %v651, %v650
      %v657 = vsel %vm401, %v652, 0
      %v660 = vsel %vm401, %v653, 0
      %v663 = vsel %vm401, %v654, 0
      %v666 = vsel %vm401, %v655, 0
      %v669 = vsel %vm414, %v643, 0
      %671 = vmatpush.bf16.msra.mxu0 0
      %672 = vmatpush.bf16.msra.mxu0 0
      %673 = vmatpush.bf16.msra.mxu0 0
      %674 = vmatpush.bf16.msra.mxu0 0
      %675 = vmatpush.bf16.msra.mxu0 0
      %676 = vmatpush.bf16.msra.mxu0 0
      %677 = vmatpush.bf16.msra.mxu0 0
      %678 = vmatpush.bf16.msra.mxu0 %v669
      %679 = vmatmul.bf16.gmra.mxu0 %v657
      %v680 = vpop.f32.mrf.mxu0
      %v681 = vadd.f32 0.0, %v680
      %v682 = vpop.f32.mrf.mxu0
      %v683 = vadd.f32 0.0, %v682
      %684 = vmatmul.bf16.gmra.mxu0 %v660
      %v685 = vpop.f32.mrf.mxu0
      %v686 = vadd.f32 0.0, %v685
      %v687 = vpop.f32.mrf.mxu0
      %v688 = vadd.f32 0.0, %v687
      %689 = vmatmul.bf16.gmra.mxu0 %v663
      %v690 = vpop.f32.mrf.mxu0
      %v691 = vadd.f32 0.0, %v690
      %v692 = vpop.f32.mrf.mxu0
      %v693 = vadd.f32 0.0, %v692
      %694 = vmatmul.bf16.gmra.mxu0 %v666
      %v695 = vpop.f32.mrf.mxu0
      %v696 = vadd.f32 0.0, %v695
      %v697 = vpop.f32.mrf.mxu0
      %v698 = vadd.f32 0.0, %v697
      %699 = vdwg.mxu0
      %v700 = vadd.f32 %v492, %v681
      %v701 = vadd.f32 %v494, %v683
      %v702 = vadd.f32 %v497, %v686
      %v703 = vadd.f32 %v499, %v688
      %v704 = vadd.f32 %v502, %v691
      %v705 = vadd.f32 %v504, %v693
      %v706 = vadd.f32 %v507, %v696
      %v707 = vadd.f32 %v509, %v698
      %s708 = scalar_lea.vmem %s354, 144
      %v709 = vld [vmem:[%s708] sm:$0xf]
      %v710 = vld [vmem:[%s708 + $0x8] sm:$0xf]
      %v711 = vld [vmem:[%s708 + $0x10] sm:$0xf]
      %v712 = vld [vmem:[%s708 + $0x18] sm:$0xf]
      %v713 = vld [vmem:[%s708 + $0x20] sm:$0xf]
      %v714 = vld [vmem:[%s708 + $0x28] sm:$0xf]
      %v715 = vld [vmem:[%s708 + $0x30] sm:$0xf]
      %v716 = vld [vmem:[%s708 + $0x38] sm:$0xf]
      %s717 = scalar_lea.vmem %s1, 6
      %v718 = vld [vmem:[%s717] sm:$0x3]
      %v727 = vunpack.c.l.b16 %v709
      %v728 = vunpack.c.l.b16 %v710
      %v729 = vunpack.c.l.b16 %v711
      %v730 = vunpack.c.l.b16 %v712
      %v731 = vunpack.c.l.b16 %v713
      %v732 = vunpack.c.l.b16 %v714
      %v733 = vunpack.c.l.b16 %v715
      %v734 = vunpack.c.l.b16 %v716
      %v735 = vpack.c.b16 %v728, %v727
      %v736 = vpack.c.b16 %v730, %v729
      %v737 = vpack.c.b16 %v732, %v731
      %v738 = vpack.c.b16 %v734, %v733
      %v740 = vsel %vm401, %v735, 0
      %v743 = vsel %vm401, %v736, 0
      %v746 = vsel %vm401, %v737, 0
      %v749 = vsel %vm401, %v738, 0
      %v752 = vsel %vm414, %v718, 0
      %754 = vmatpush.bf16.msra.mxu0 0
      %755 = vmatpush.bf16.msra.mxu0 0
      %756 = vmatpush.bf16.msra.mxu0 0
      %757 = vmatpush.bf16.msra.mxu0 0
      %758 = vmatpush.bf16.msra.mxu0 0
      %759 = vmatpush.bf16.msra.mxu0 0
      %760 = vmatpush.bf16.msra.mxu0 0
      %761 = vmatpush.bf16.msra.mxu0 %v752
      %762 = vmatmul.bf16.gmra.mxu0 %v740
      %v763 = vpop.f32.mrf.mxu0
      %v764 = vadd.f32 0.0, %v763
      %v765 = vpop.f32.mrf.mxu0
      %v766 = vadd.f32 0.0, %v765
      %767 = vmatmul.bf16.gmra.mxu0 %v743
      %v768 = vpop.f32.mrf.mxu0
      %v769 = vadd.f32 0.0, %v768
      %v770 = vpop.f32.mrf.mxu0
      %v771 = vadd.f32 0.0, %v770
      %772 = vmatmul.bf16.gmra.mxu0 %v746
      %v773 = vpop.f32.mrf.mxu0
      %v774 = vadd.f32 0.0, %v773
      %v775 = vpop.f32.mrf.mxu0
      %v776 = vadd.f32 0.0, %v775
      %777 = vmatmul.bf16.gmra.mxu0 %v749
      %v778 = vpop.f32.mrf.mxu0
      %v779 = vadd.f32 0.0, %v778
      %v780 = vpop.f32.mrf.mxu0
      %v781 = vadd.f32 0.0, %v780
      %782 = vdwg.mxu0
      %v783 = vadd.f32 %v700, %v764
      %v784 = vadd.f32 %v701, %v766
      %v785 = vadd.f32 %v702, %v769
      %v786 = vadd.f32 %v703, %v771
      %v787 = vadd.f32 %v704, %v774
      %v788 = vadd.f32 %v705, %v776
      %v789 = vadd.f32 %v706, %v779
      %v790 = vadd.f32 %v707, %v781
      %s791 = scalar_lea.vmem %s354, 216
      %v792 = vld [vmem:[%s791] sm:$0xf]
      %v793 = vld [vmem:[%s791 + $0x8] sm:$0xf]
      %v794 = vld [vmem:[%s791 + $0x10] sm:$0xf]
      %v795 = vld [vmem:[%s791 + $0x18] sm:$0xf]
      %v796 = vld [vmem:[%s791 + $0x20] sm:$0xf]
      %v797 = vld [vmem:[%s791 + $0x28] sm:$0xf]
      %v798 = vld [vmem:[%s791 + $0x30] sm:$0xf]
      %v799 = vld [vmem:[%s791 + $0x38] sm:$0xf]
      %s800 = scalar_lea.vmem %s1, 8
      %v801 = vld [vmem:[%s800] sm:$0x3]
      %v810 = vunpack.c.l.b16 %v792
      %v811 = vunpack.c.l.b16 %v793
      %v812 = vunpack.c.l.b16 %v794
      %v813 = vunpack.c.l.b16 %v795
      %v814 = vunpack.c.l.b16 %v796
      %v815 = vunpack.c.l.b16 %v797
      %v816 = vunpack.c.l.b16 %v798
      %v817 = vunpack.c.l.b16 %v799
      %v818 = vpack.c.b16 %v811, %v810
      %v819 = vpack.c.b16 %v813, %v812
      %v820 = vpack.c.b16 %v815, %v814
      %v821 = vpack.c.b16 %v817, %v816
      %v823 = vsel %vm401, %v818, 0
      %v826 = vsel %vm401, %v819, 0
      %v829 = vsel %vm401, %v820, 0
      %v832 = vsel %vm401, %v821, 0
      %v835 = vsel %vm414, %v801, 0
      %837 = vmatpush.bf16.msra.mxu0 0
      %838 = vmatpush.bf16.msra.mxu0 0
      %839 = vmatpush.bf16.msra.mxu0 0
      %840 = vmatpush.bf16.msra.mxu0 0
      %841 = vmatpush.bf16.msra.mxu0 0
      %842 = vmatpush.bf16.msra.mxu0 0
      %843 = vmatpush.bf16.msra.mxu0 0
      %844 = vmatpush.bf16.msra.mxu0 %v835
      %845 = vmatmul.bf16.gmra.mxu0 %v823
      %v846 = vpop.f32.mrf.mxu0
      %v847 = vadd.f32 0.0, %v846
      %v848 = vpop.f32.mrf.mxu0
      %v849 = vadd.f32 0.0, %v848
      %850 = vmatmul.bf16.gmra.mxu0 %v826
      %v851 = vpop.f32.mrf.mxu0
      %v852 = vadd.f32 0.0, %v851
      %v853 = vpop.f32.mrf.mxu0
      %v854 = vadd.f32 0.0, %v853
      %855 = vmatmul.bf16.gmra.mxu0 %v829
      %v856 = vpop.f32.mrf.mxu0
      %v857 = vadd.f32 0.0, %v856
      %v858 = vpop.f32.mrf.mxu0
      %v859 = vadd.f32 0.0, %v858
      %860 = vmatmul.bf16.gmra.mxu0 %v832
      %v861 = vpop.f32.mrf.mxu0
      %v862 = vadd.f32 0.0, %v861
      %v863 = vpop.f32.mrf.mxu0
      %v864 = vadd.f32 0.0, %v863
      %865 = vdwg.mxu0
      %v866 = vadd.f32 %v783, %v847
      %v867 = vadd.f32 %v784, %v849
      %v868 = vadd.f32 %v785, %v852
      %v869 = vadd.f32 %v786, %v854
      %v870 = vadd.f32 %v787, %v857
      %v871 = vadd.f32 %v788, %v859
      %v872 = vadd.f32 %v789, %v862
      %v873 = vadd.f32 %v790, %v864
      %v874 = vld [vmem:[%s708] sm:$0xf]
      %v875 = vld [vmem:[%s708 + $0x4] sm:$0x1]
      %v876 = vld [vmem:[%s708 + $0x8] sm:$0xf]
      %v877 = vld [vmem:[%s708 + $0xc] sm:$0x1]
      %v878 = vld [vmem:[%s708 + $0x10] sm:$0xf]
      %v879 = vld [vmem:[%s708 + $0x14] sm:$0x1]
      %v880 = vld [vmem:[%s708 + $0x18] sm:$0xf]
      %v881 = vld [vmem:[%s708 + $0x1c] sm:$0x1]
      %v882 = vld [vmem:[%s708 + $0x20] sm:$0xf]
      %v883 = vld [vmem:[%s708 + $0x24] sm:$0x1]
      %v884 = vld [vmem:[%s708 + $0x28] sm:$0xf]
      %v885 = vld [vmem:[%s708 + $0x2c] sm:$0x1]
      %v886 = vld [vmem:[%s708 + $0x30] sm:$0xf]
      %v887 = vld [vmem:[%s708 + $0x34] sm:$0x1]
      %v888 = vld [vmem:[%s708 + $0x38] sm:$0xf]
      %v889 = vld [vmem:[%s708 + $0x3c] sm:$0x1]
      %v891 = vshrl.u32 %v874, 16
      %v893 = vrot.slane %v891, 4
      %v894 = vshll.u32 %v874, 16
      %v896 = vrot.slane %v894, 5
      %v897 = vor.u32 %v893, %v896
      %v898 = vrot.slane %v897, 4
      %v900 = vshll.u32 %v875, 16
      %v902 = vrot.slane %v900, 5
      %v903 = vsel %vm529, %v898, %v902
      %v905 = vshrl.u32 %v876, 16
      %v907 = vrot.slane %v905, 4
      %v908 = vshll.u32 %v876, 16
      %v910 = vrot.slane %v908, 5
      %v911 = vor.u32 %v907, %v910
      %v912 = vrot.slane %v911, 4
      %v914 = vshll.u32 %v877, 16
      %v916 = vrot.slane %v914, 5
      %v917 = vsel %vm529, %v912, %v916
      %v919 = vshrl.u32 %v878, 16
      %v921 = vrot.slane %v919, 4
      %v922 = vshll.u32 %v878, 16
      %v924 = vrot.slane %v922, 5
      %v925 = vor.u32 %v921, %v924
      %v926 = vrot.slane %v925, 4
      %v928 = vshll.u32 %v879, 16
      %v930 = vrot.slane %v928, 5
      %v931 = vsel %vm529, %v926, %v930
      %v933 = vshrl.u32 %v880, 16
      %v935 = vrot.slane %v933, 4
      %v936 = vshll.u32 %v880, 16
      %v938 = vrot.slane %v936, 5
      %v939 = vor.u32 %v935, %v938
      %v940 = vrot.slane %v939, 4
      %v942 = vshll.u32 %v881, 16
      %v944 = vrot.slane %v942, 5
      %v945 = vsel %vm529, %v940, %v944
      %v947 = vshrl.u32 %v882, 16
      %v949 = vrot.slane %v947, 4
      %v950 = vshll.u32 %v882, 16
      %v952 = vrot.slane %v950, 5
      %v953 = vor.u32 %v949, %v952
      %v954 = vrot.slane %v953, 4
      %v956 = vshll.u32 %v883, 16
      %v958 = vrot.slane %v956, 5
      %v959 = vsel %vm529, %v954, %v958
      %v961 = vshrl.u32 %v884, 16
      %v963 = vrot.slane %v961, 4
      %v964 = vshll.u32 %v884, 16
      %v966 = vrot.slane %v964, 5
      %v967 = vor.u32 %v963, %v966
      %v968 = vrot.slane %v967, 4
      %v970 = vshll.u32 %v885, 16
      %v972 = vrot.slane %v970, 5
      %v973 = vsel %vm529, %v968, %v972
      %v975 = vshrl.u32 %v886, 16
      %v977 = vrot.slane %v975, 4
      %v978 = vshll.u32 %v886, 16
      %v980 = vrot.slane %v978, 5
      %v981 = vor.u32 %v977, %v980
      %v982 = vrot.slane %v981, 4
      %v984 = vshll.u32 %v887, 16
      %v986 = vrot.slane %v984, 5
      %v987 = vsel %vm529, %v982, %v986
      %v989 = vshrl.u32 %v888, 16
      %v991 = vrot.slane %v989, 4
      %v992 = vshll.u32 %v888, 16
      %v994 = vrot.slane %v992, 5
      %v995 = vor.u32 %v991, %v994
      %v996 = vrot.slane %v995, 4
      %v998 = vshll.u32 %v889, 16
      %v1000 = vrot.slane %v998, 5
      %v1001 = vsel %vm529, %v996, %v1000
      %s1002 = scalar_lea.vmem %s1, 10
      %v1003 = vld [vmem:[%s1002] sm:$0x3]
      %v1004 = vunpack.c.l.b16 %v903
      %v1005 = vunpack.c.l.b16 %v917
      %v1006 = vunpack.c.l.b16 %v931
      %v1007 = vunpack.c.l.b16 %v945
      %v1008 = vunpack.c.l.b16 %v959
      %v1009 = vunpack.c.l.b16 %v973
      %v1010 = vunpack.c.l.b16 %v987
      %v1011 = vunpack.c.l.b16 %v1001
      %v1012 = vpack.c.b16 %v1005, %v1004
      %v1013 = vpack.c.b16 %v1007, %v1006
      %v1014 = vpack.c.b16 %v1009, %v1008
      %v1015 = vpack.c.b16 %v1011, %v1010
      %v1017 = vsel %vm401, %v1012, 0
      %v1020 = vsel %vm401, %v1013, 0
      %v1023 = vsel %vm401, %v1014, 0
      %v1026 = vsel %vm401, %v1015, 0
      %v1029 = vsel %vm414, %v1003, 0
      %1031 = vmatpush.bf16.msra.mxu0 0
      %1032 = vmatpush.bf16.msra.mxu0 0
      %1033 = vmatpush.bf16.msra.mxu0 0
      %1034 = vmatpush.bf16.msra.mxu0 0
      %1035 = vmatpush.bf16.msra.mxu0 0
      %1036 = vmatpush.bf16.msra.mxu0 0
      %1037 = vmatpush.bf16.msra.mxu0 0
      %1038 = vmatpush.bf16.msra.mxu0 %v1029
      %1039 = vmatmul.bf16.gmra.mxu0 %v1017
      %v1040 = vpop.f32.mrf.mxu0
      %v1041 = vadd.f32 0.0, %v1040
      %v1042 = vpop.f32.mrf.mxu0
      %v1043 = vadd.f32 0.0, %v1042
      %1044 = vmatmul.bf16.gmra.mxu0 %v1020
      %v1045 = vpop.f32.mrf.mxu0
      %v1046 = vadd.f32 0.0, %v1045
      %v1047 = vpop.f32.mrf.mxu0
      %v1048 = vadd.f32 0.0, %v1047
      %1049 = vmatmul.bf16.gmra.mxu0 %v1023
      %v1050 = vpop.f32.mrf.mxu0
      %v1051 = vadd.f32 0.0, %v1050
      %v1052 = vpop.f32.mrf.mxu0
      %v1053 = vadd.f32 0.0, %v1052
      %1054 = vmatmul.bf16.gmra.mxu0 %v1026
      %v1055 = vpop.f32.mrf.mxu0
      %v1056 = vadd.f32 0.0, %v1055
      %v1057 = vpop.f32.mrf.mxu0
      %v1058 = vadd.f32 0.0, %v1057
      %1059 = vdwg.mxu0
      %v1060 = vadd.f32 %v866, %v1041
      %v1061 = vadd.f32 %v867, %v1043
      %v1062 = vadd.f32 %v868, %v1046
      %v1063 = vadd.f32 %v869, %v1048
      %v1064 = vadd.f32 %v870, %v1051
      %v1065 = vadd.f32 %v871, %v1053
      %v1066 = vadd.f32 %v872, %v1056
      %v1067 = vadd.f32 %v873, %v1058
      %s1068 = scalar_lea.vmem %s354, 8
      %v1069 = vld [vmem:[%s1068] sm:$0xf]
      %v1070 = vld [vmem:[%s1068 + $0x8] sm:$0xf]
      %v1071 = vld [vmem:[%s1068 + $0x10] sm:$0xf]
      %v1072 = vld [vmem:[%s1068 + $0x18] sm:$0xf]
      %v1073 = vld [vmem:[%s1068 + $0x20] sm:$0xf]
      %v1074 = vld [vmem:[%s1068 + $0x28] sm:$0xf]
      %v1075 = vld [vmem:[%s1068 + $0x30] sm:$0xf]
      %v1076 = vld [vmem:[%s1068 + $0x38] sm:$0xf]
      %s1077 = scalar_lea.vmem %s1, 12
      %v1078 = vld [vmem:[%s1077] sm:$0x3]
      %v1087 = vunpack.c.l.b16 %v1069
      %v1088 = vunpack.c.l.b16 %v1070
      %v1089 = vunpack.c.l.b16 %v1071
      %v1090 = vunpack.c.l.b16 %v1072
      %v1091 = vunpack.c.l.b16 %v1073
      %v1092 = vunpack.c.l.b16 %v1074
      %v1093 = vunpack.c.l.b16 %v1075
      %v1094 = vunpack.c.l.b16 %v1076
      %v1095 = vpack.c.b16 %v1088, %v1087
      %v1096 = vpack.c.b16 %v1090, %v1089
      %v1097 = vpack.c.b16 %v1092, %v1091
      %v1098 = vpack.c.b16 %v1094, %v1093
      %v1100 = vsel %vm401, %v1095, 0
      %v1103 = vsel %vm401, %v1096, 0
      %v1106 = vsel %vm401, %v1097, 0
      %v1109 = vsel %vm401, %v1098, 0
      %v1112 = vsel %vm414, %v1078, 0
      %1114 = vmatpush.bf16.msra.mxu0 0
      %1115 = vmatpush.bf16.msra.mxu0 0
      %1116 = vmatpush.bf16.msra.mxu0 0
      %1117 = vmatpush.bf16.msra.mxu0 0
      %1118 = vmatpush.bf16.msra.mxu0 0
      %1119 = vmatpush.bf16.msra.mxu0 0
      %1120 = vmatpush.bf16.msra.mxu0 0
      %1121 = vmatpush.bf16.msra.mxu0 %v1112
      %1122 = vmatmul.bf16.gmra.mxu0 %v1100
      %v1123 = vpop.f32.mrf.mxu0
      %v1124 = vadd.f32 0.0, %v1123
      %v1125 = vpop.f32.mrf.mxu0
      %v1126 = vadd.f32 0.0, %v1125
      %1127 = vmatmul.bf16.gmra.mxu0 %v1103
      %v1128 = vpop.f32.mrf.mxu0
      %v1129 = vadd.f32 0.0, %v1128
      %v1130 = vpop.f32.mrf.mxu0
      %v1131 = vadd.f32 0.0, %v1130
      %1132 = vmatmul.bf16.gmra.mxu0 %v1106
      %v1133 = vpop.f32.mrf.mxu0
      %v1134 = vadd.f32 0.0, %v1133
      %v1135 = vpop.f32.mrf.mxu0
      %v1136 = vadd.f32 0.0, %v1135
      %1137 = vmatmul.bf16.gmra.mxu0 %v1109
      %v1138 = vpop.f32.mrf.mxu0
      %v1139 = vadd.f32 0.0, %v1138
      %v1140 = vpop.f32.mrf.mxu0
      %v1141 = vadd.f32 0.0, %v1140
      %1142 = vdwg.mxu0
      %v1143 = vadd.f32 %v1060, %v1124
      %v1144 = vadd.f32 %v1061, %v1126
      %v1145 = vadd.f32 %v1062, %v1129
      %v1146 = vadd.f32 %v1063, %v1131
      %v1147 = vadd.f32 %v1064, %v1134
      %v1148 = vadd.f32 %v1065, %v1136
      %v1149 = vadd.f32 %v1066, %v1139
      %v1150 = vadd.f32 %v1067, %v1141
      %s1151 = scalar_lea.vmem %s354, 80
      %v1152 = vld [vmem:[%s1151] sm:$0xf]
      %v1153 = vld [vmem:[%s1151 + $0x8] sm:$0xf]
      %v1154 = vld [vmem:[%s1151 + $0x10] sm:$0xf]
      %v1155 = vld [vmem:[%s1151 + $0x18] sm:$0xf]
      %v1156 = vld [vmem:[%s1151 + $0x20] sm:$0xf]
      %v1157 = vld [vmem:[%s1151 + $0x28] sm:$0xf]
      %v1158 = vld [vmem:[%s1151 + $0x30] sm:$0xf]
      %v1159 = vld [vmem:[%s1151 + $0x38] sm:$0xf]
      %s1160 = scalar_lea.vmem %s1, 14
      %v1161 = vld [vmem:[%s1160] sm:$0x3]
      %v1170 = vunpack.c.l.b16 %v1152
      %v1171 = vunpack.c.l.b16 %v1153
      %v1172 = vunpack.c.l.b16 %v1154
      %v1173 = vunpack.c.l.b16 %v1155
      %v1174 = vunpack.c.l.b16 %v1156
      %v1175 = vunpack.c.l.b16 %v1157
      %v1176 = vunpack.c.l.b16 %v1158
      %v1177 = vunpack.c.l.b16 %v1159
      %v1178 = vpack.c.b16 %v1171, %v1170
      %v1179 = vpack.c.b16 %v1173, %v1172
      %v1180 = vpack.c.b16 %v1175, %v1174
      %v1181 = vpack.c.b16 %v1177, %v1176
      %v1183 = vsel %vm401, %v1178, 0
      %v1186 = vsel %vm401, %v1179, 0
      %v1189 = vsel %vm401, %v1180, 0
      %v1192 = vsel %vm401, %v1181, 0
      %v1195 = vsel %vm414, %v1161, 0
      %1197 = vmatpush.bf16.msra.mxu0 0
      %1198 = vmatpush.bf16.msra.mxu0 0
      %1199 = vmatpush.bf16.msra.mxu0 0
      %1200 = vmatpush.bf16.msra.mxu0 0
      %1201 = vmatpush.bf16.msra.mxu0 0
      %1202 = vmatpush.bf16.msra.mxu0 0
      %1203 = vmatpush.bf16.msra.mxu0 0
      %1204 = vmatpush.bf16.msra.mxu0 %v1195
      %1205 = vmatmul.bf16.gmra.mxu0 %v1183
      %v1206 = vpop.f32.mrf.mxu0
      %v1207 = vadd.f32 0.0, %v1206
      %v1208 = vpop.f32.mrf.mxu0
      %v1209 = vadd.f32 0.0, %v1208
      %1210 = vmatmul.bf16.gmra.mxu0 %v1186
      %v1211 = vpop.f32.mrf.mxu0
      %v1212 = vadd.f32 0.0, %v1211
      %v1213 = vpop.f32.mrf.mxu0
      %v1214 = vadd.f32 0.0, %v1213
      %1215 = vmatmul.bf16.gmra.mxu0 %v1189
      %v1216 = vpop.f32.mrf.mxu0
      %v1217 = vadd.f32 0.0, %v1216
      %v1218 = vpop.f32.mrf.mxu0
      %v1219 = vadd.f32 0.0, %v1218
      %1220 = vmatmul.bf16.gmra.mxu0 %v1192
      %v1221 = vpop.f32.mrf.mxu0
      %v1222 = vadd.f32 0.0, %v1221
      %v1223 = vpop.f32.mrf.mxu0
      %v1224 = vadd.f32 0.0, %v1223
      %1225 = vdwg.mxu0
      %v1226 = vadd.f32 %v1143, %v1207
      %v1227 = vadd.f32 %v1144, %v1209
      %v1228 = vadd.f32 %v1145, %v1212
      %v1229 = vadd.f32 %v1146, %v1214
      %v1230 = vadd.f32 %v1147, %v1217
      %v1231 = vadd.f32 %v1148, %v1219
      %v1232 = vadd.f32 %v1149, %v1222
      %v1233 = vadd.f32 %v1150, %v1224
      %v1234 = vld [vmem:[%s1068] sm:$0xf]
      %v1235 = vld [vmem:[%s1068 + $0x4] sm:$0x1]
      %v1236 = vld [vmem:[%s1068 + $0x8] sm:$0xf]
      %v1237 = vld [vmem:[%s1068 + $0xc] sm:$0x1]
      %v1238 = vld [vmem:[%s1068 + $0x10] sm:$0xf]
      %v1239 = vld [vmem:[%s1068 + $0x14] sm:$0x1]
      %v1240 = vld [vmem:[%s1068 + $0x18] sm:$0xf]
      %v1241 = vld [vmem:[%s1068 + $0x1c] sm:$0x1]
      %v1242 = vld [vmem:[%s1068 + $0x20] sm:$0xf]
      %v1243 = vld [vmem:[%s1068 + $0x24] sm:$0x1]
      %v1244 = vld [vmem:[%s1068 + $0x28] sm:$0xf]
      %v1245 = vld [vmem:[%s1068 + $0x2c] sm:$0x1]
      %v1246 = vld [vmem:[%s1068 + $0x30] sm:$0xf]
      %v1247 = vld [vmem:[%s1068 + $0x34] sm:$0x1]
      %v1248 = vld [vmem:[%s1068 + $0x38] sm:$0xf]
      %v1249 = vld [vmem:[%s1068 + $0x3c] sm:$0x1]
      %v1251 = vshrl.u32 %v1234, 16
      %v1253 = vrot.slane %v1251, 4
      %v1254 = vshll.u32 %v1234, 16
      %v1256 = vrot.slane %v1254, 5
      %v1257 = vor.u32 %v1253, %v1256
      %v1258 = vrot.slane %v1257, 4
      %v1260 = vshll.u32 %v1235, 16
      %v1262 = vrot.slane %v1260, 5
      %v1263 = vsel %vm529, %v1258, %v1262
      %v1265 = vshrl.u32 %v1236, 16
      %v1267 = vrot.slane %v1265, 4
      %v1268 = vshll.u32 %v1236, 16
      %v1270 = vrot.slane %v1268, 5
      %v1271 = vor.u32 %v1267, %v1270
      %v1272 = vrot.slane %v1271, 4
      %v1274 = vshll.u32 %v1237, 16
      %v1276 = vrot.slane %v1274, 5
      %v1277 = vsel %vm529, %v1272, %v1276
      %v1279 = vshrl.u32 %v1238, 16
      %v1281 = vrot.slane %v1279, 4
      %v1282 = vshll.u32 %v1238, 16
      %v1284 = vrot.slane %v1282, 5
      %v1285 = vor.u32 %v1281, %v1284
      %v1286 = vrot.slane %v1285, 4
      %v1288 = vshll.u32 %v1239, 16
      %v1290 = vrot.slane %v1288, 5
      %v1291 = vsel %vm529, %v1286, %v1290
      %v1293 = vshrl.u32 %v1240, 16
      %v1295 = vrot.slane %v1293, 4
      %v1296 = vshll.u32 %v1240, 16
      %v1298 = vrot.slane %v1296, 5
      %v1299 = vor.u32 %v1295, %v1298
      %v1300 = vrot.slane %v1299, 4
      %v1302 = vshll.u32 %v1241, 16
      %v1304 = vrot.slane %v1302, 5
      %v1305 = vsel %vm529, %v1300, %v1304
      %v1307 = vshrl.u32 %v1242, 16
      %v1309 = vrot.slane %v1307, 4
      %v1310 = vshll.u32 %v1242, 16
      %v1312 = vrot.slane %v1310, 5
      %v1313 = vor.u32 %v1309, %v1312
      %v1314 = vrot.slane %v1313, 4
      %v1316 = vshll.u32 %v1243, 16
      %v1318 = vrot.slane %v1316, 5
      %v1319 = vsel %vm529, %v1314, %v1318
      %v1321 = vshrl.u32 %v1244, 16
      %v1323 = vrot.slane %v1321, 4
      %v1324 = vshll.u32 %v1244, 16
      %v1326 = vrot.slane %v1324, 5
      %v1327 = vor.u32 %v1323, %v1326
      %v1328 = vrot.slane %v1327, 4
      %v1330 = vshll.u32 %v1245, 16
      %v1332 = vrot.slane %v1330, 5
      %v1333 = vsel %vm529, %v1328, %v1332
      %v1335 = vshrl.u32 %v1246, 16
      %v1337 = vrot.slane %v1335, 4
      %v1338 = vshll.u32 %v1246, 16
      %v1340 = vrot.slane %v1338, 5
      %v1341 = vor.u32 %v1337, %v1340
      %v1342 = vrot.slane %v1341, 4
      %v1344 = vshll.u32 %v1247, 16
      %v1346 = vrot.slane %v1344, 5
      %v1347 = vsel %vm529, %v1342, %v1346
      %v1349 = vshrl.u32 %v1248, 16
      %v1351 = vrot.slane %v1349, 4
      %v1352 = vshll.u32 %v1248, 16
      %v1354 = vrot.slane %v1352, 5
      %v1355 = vor.u32 %v1351, %v1354
      %v1356 = vrot.slane %v1355, 4
      %v1358 = vshll.u32 %v1249, 16
      %v1360 = vrot.slane %v1358, 5
      %v1361 = vsel %vm529, %v1356, %v1360
      %s1362 = scalar_lea.vmem %s1, 16
      %v1363 = vld [vmem:[%s1362] sm:$0x3]
      %v1364 = vunpack.c.l.b16 %v1263
      %v1365 = vunpack.c.l.b16 %v1277
      %v1366 = vunpack.c.l.b16 %v1291
      %v1367 = vunpack.c.l.b16 %v1305
      %v1368 = vunpack.c.l.b16 %v1319
      %v1369 = vunpack.c.l.b16 %v1333
      %v1370 = vunpack.c.l.b16 %v1347
      %v1371 = vunpack.c.l.b16 %v1361
      %v1372 = vpack.c.b16 %v1365, %v1364
      %v1373 = vpack.c.b16 %v1367, %v1366
      %v1374 = vpack.c.b16 %v1369, %v1368
      %v1375 = vpack.c.b16 %v1371, %v1370
      %v1377 = vsel %vm401, %v1372, 0
      %v1380 = vsel %vm401, %v1373, 0
      %v1383 = vsel %vm401, %v1374, 0
      %v1386 = vsel %vm401, %v1375, 0
      %v1389 = vsel %vm414, %v1363, 0
      %1391 = vmatpush.bf16.msra.mxu0 0
      %1392 = vmatpush.bf16.msra.mxu0 0
      %1393 = vmatpush.bf16.msra.mxu0 0
      %1394 = vmatpush.bf16.msra.mxu0 0
      %1395 = vmatpush.bf16.msra.mxu0 0
      %1396 = vmatpush.bf16.msra.mxu0 0
      %1397 = vmatpush.bf16.msra.mxu0 0
      %1398 = vmatpush.bf16.msra.mxu0 %v1389
      %1399 = vmatmul.bf16.gmra.mxu0 %v1377
      %v1400 = vpop.f32.mrf.mxu0
      %v1401 = vadd.f32 0.0, %v1400
      %v1402 = vpop.f32.mrf.mxu0
      %v1403 = vadd.f32 0.0, %v1402
      %1404 = vmatmul.bf16.gmra.mxu0 %v1380
      %v1405 = vpop.f32.mrf.mxu0
      %v1406 = vadd.f32 0.0, %v1405
      %v1407 = vpop.f32.mrf.mxu0
      %v1408 = vadd.f32 0.0, %v1407
      %1409 = vmatmul.bf16.gmra.mxu0 %v1383
      %v1410 = vpop.f32.mrf.mxu0
      %v1411 = vadd.f32 0.0, %v1410
      %v1412 = vpop.f32.mrf.mxu0
      %v1413 = vadd.f32 0.0, %v1412
      %1414 = vmatmul.bf16.gmra.mxu0 %v1386
      %v1415 = vpop.f32.mrf.mxu0
      %v1416 = vadd.f32 0.0, %v1415
      %v1417 = vpop.f32.mrf.mxu0
      %v1418 = vadd.f32 0.0, %v1417
      %1419 = vdwg.mxu0
      %v1420 = vadd.f32 %v1226, %v1401
      %v1421 = vadd.f32 %v1227, %v1403
      %v1422 = vadd.f32 %v1228, %v1406
      %v1423 = vadd.f32 %v1229, %v1408
      %v1424 = vadd.f32 %v1230, %v1411
      %v1425 = vadd.f32 %v1231, %v1413
      %v1426 = vadd.f32 %v1232, %v1416
      %v1427 = vadd.f32 %v1233, %v1418
      %v1428 = vld [vmem:[%s2] sm:$0x1]
      %v1430 = vperm.slane %v1428, 0
      %v1432 = vmul.f32 %v1420, %v1430
      %v1433 = vmul.f32 %v1421, %v1430
      %v1434 = vmul.f32 %v1422, %v1430
      %v1435 = vmul.f32 %v1423, %v1430
      %v1436 = vmul.f32 %v1424, %v1430
      %v1437 = vmul.f32 %v1425, %v1430
      %v1438 = vmul.f32 %v1426, %v1430
      %v1439 = vmul.f32 %v1427, %v1430
      %v1440 = vld [vmem:[%s3] sm:$0x1]
      %v1442 = vperm.slane %v1440, 0
      %v1444 = vadd.f32 %v1432, %v1442
      %v1445 = vadd.f32 %v1433, %v1442
      %v1446 = vadd.f32 %v1434, %v1442
      %v1447 = vadd.f32 %v1435, %v1442
      %v1448 = vadd.f32 %v1436, %v1442
      %v1449 = vadd.f32 %v1437, %v1442
      %v1450 = vadd.f32 %v1438, %v1442
      %v1451 = vadd.f32 %v1439, %v1442
      %v1452 = vmax.f32 %v1444, 0.0
      %v1453 = vmax.f32 %v1445, 0.0
      %v1454 = vmax.f32 %v1446, 0.0
      %v1455 = vmax.f32 %v1447, 0.0
      %v1456 = vmax.f32 %v1448, 0.0
      %v1457 = vmax.f32 %v1449, 0.0
      %v1458 = vmax.f32 %v1450, 0.0
      %v1459 = vmax.f32 %v1451, 0.0
      %vm1460 = vcmask 60416
      %1461 = vst.msk [vmem:[#allocation2] sm:$0xf] %vm1460, 0
      %vm1462 = vcmask 57344
      %1463 = vst.msk [vmem:[#allocation2 + $0x4] sm:$0x1] %vm1462, 0
      %1464 = vst.msk [vmem:[#allocation2 + $0x8] sm:$0xf] %vm1460, 0
      %1465 = vst.msk [vmem:[#allocation2 + $0xc] sm:$0x1] %vm1462, 0
      %1466 = vst.msk [vmem:[#allocation2 + $0x10] sm:$0xf] %vm1460, 0
      %1467 = vst.msk [vmem:[#allocation2 + $0x14] sm:$0x1] %vm1462, 0
      %1468 = vst.msk [vmem:[#allocation2 + $0x18] sm:$0xf] %vm1460, 0
      %1469 = vst.msk [vmem:[#allocation2 + $0x1c] sm:$0x1] %vm1462, 0
      %1470 = vst.msk [vmem:[#allocation2 + $0x20] sm:$0xf] %vm1460, 0
      %1471 = vst.msk [vmem:[#allocation2 + $0x24] sm:$0x1] %vm1462, 0
      %1472 = vst.msk [vmem:[#allocation2 + $0x28] sm:$0xf] %vm1460, 0
      %1473 = vst.msk [vmem:[#allocation2 + $0x2c] sm:$0x1] %vm1462, 0
      %1474 = vst.msk [vmem:[#allocation2 + $0x30] sm:$0xf] %vm1460, 0
      %1475 = vst.msk [vmem:[#allocation2 + $0x34] sm:$0x1] %vm1462, 0
      %1476 = vst.msk [vmem:[#allocation2 + $0x38] sm:$0xf] %vm1460, 0
      %1477 = vst.msk [vmem:[#allocation2 + $0x3c] sm:$0x1] %vm1462, 0
      %1478 = vst.msk [vmem:[#allocation2 + $0x40] sm:$0xf] %vm1460, 0
      %1479 = vst.msk [vmem:[#allocation2 + $0x44] sm:$0x1] %vm1462, 0
      %1480 = vst.msk [vmem:[#allocation2 + $0x48] sm:$0xf] %vm1460, 0
      %1481 = vst.msk [vmem:[#allocation2 + $0x4c] sm:$0x1] %vm1462, 0
      %v1482 = vpack.c.bf16 %v1452, %v1452
      %v1483 = vpack.c.bf16 %v1453, %v1453
      %v1484 = vpack.c.bf16 %v1454, %v1454
      %v1485 = vpack.c.bf16 %v1455, %v1455
      %v1486 = vpack.c.bf16 %v1456, %v1456
      %v1487 = vpack.c.bf16 %v1457, %v1457
      %v1488 = vpack.c.bf16 %v1458, %v1458
      %v1489 = vpack.c.bf16 %v1459, %v1459
      %v1491 = vshrl.u32 %v1482, 16
      %v1493 = vrot.slane %v1491, 7
      %v1494 = vshll.u32 %v1482, 16
      %v1496 = vor.u32 %v1493, %v1494
      %v1497 = vrot.slane %v1493, 4
      %v1499 = vshrl.u32 %v1483, 16
      %v1501 = vrot.slane %v1499, 7
      %v1502 = vshll.u32 %v1483, 16
      %v1504 = vor.u32 %v1501, %v1502
      %v1505 = vrot.slane %v1501, 4
      %v1507 = vshrl.u32 %v1484, 16
      %v1509 = vrot.slane %v1507, 7
      %v1510 = vshll.u32 %v1484, 16
      %v1512 = vor.u32 %v1509, %v1510
      %v1513 = vrot.slane %v1509, 4
      %v1515 = vshrl.u32 %v1485, 16
      %v1517 = vrot.slane %v1515, 7
      %v1518 = vshll.u32 %v1485, 16
      %v1520 = vor.u32 %v1517, %v1518
      %v1521 = vrot.slane %v1517, 4
      %v1523 = vshrl.u32 %v1486, 16
      %v1525 = vrot.slane %v1523, 7
      %v1526 = vshll.u32 %v1486, 16
      %v1528 = vor.u32 %v1525, %v1526
      %v1529 = vrot.slane %v1525, 4
      %v1531 = vshrl.u32 %v1487, 16
      %v1533 = vrot.slane %v1531, 7
      %v1534 = vshll.u32 %v1487, 16
      %v1536 = vor.u32 %v1533, %v1534
      %v1537 = vrot.slane %v1533, 4
      %v1539 = vshrl.u32 %v1488, 16
      %v1541 = vrot.slane %v1539, 7
      %v1542 = vshll.u32 %v1488, 16
      %v1544 = vor.u32 %v1541, %v1542
      %v1545 = vrot.slane %v1541, 4
      %v1547 = vshrl.u32 %v1489, 16
      %v1549 = vrot.slane %v1547, 7
      %v1550 = vshll.u32 %v1489, 16
      %v1552 = vor.u32 %v1549, %v1550
      %v1553 = vrot.slane %v1549, 4
      %s1570 = scalar_lea.vmem [#allocation2], 8
      %vm1571 = vcmask 60416
      %vm1572 = vsmask.f32 7938
      %vm1573 = vmand %vm1571, %vm1572
      %v1574 = vld [vmem:[%s1570] sm:$0xf]
      %v1575 = vsel %vm1573, %v1496, %v1574
      %1576 = vst [vmem:[%s1570] sm:$0xf] %v1575
      %vm1577 = vcmask 57344
      %vm1578 = vsmask.f32 256
      %vm1579 = vmand %vm1577, %vm1578
      %v1580 = vld [vmem:[%s1570 + $0x4] sm:$0x1]
      %v1581 = vsel %vm1579, %v1497, %v1580
      %1582 = vst [vmem:[%s1570 + $0x4] sm:$0x1] %v1581
      %v1583 = vld [vmem:[%s1570 + $0x8] sm:$0xf]
      %v1584 = vsel %vm1573, %v1504, %v1583
      %1585 = vst [vmem:[%s1570 + $0x8] sm:$0xf] %v1584
      %v1586 = vld [vmem:[%s1570 + $0xc] sm:$0x1]
      %v1587 = vsel %vm1579, %v1505, %v1586
      %1588 = vst [vmem:[%s1570 + $0xc] sm:$0x1] %v1587
      %v1589 = vld [vmem:[%s1570 + $0x10] sm:$0xf]
      %v1590 = vsel %vm1573, %v1512, %v1589
      %1591 = vst [vmem:[%s1570 + $0x10] sm:$0xf] %v1590
      %v1592 = vld [vmem:[%s1570 + $0x14] sm:$0x1]
      %v1593 = vsel %vm1579, %v1513, %v1592
      %1594 = vst [vmem:[%s1570 + $0x14] sm:$0x1] %v1593
      %v1595 = vld [vmem:[%s1570 + $0x18] sm:$0xf]
      %v1596 = vsel %vm1573, %v1520, %v1595
      %1597 = vst [vmem:[%s1570 + $0x18] sm:$0xf] %v1596
      %v1598 = vld [vmem:[%s1570 + $0x1c] sm:$0x1]
      %v1599 = vsel %vm1579, %v1521, %v1598
      %1600 = vst [vmem:[%s1570 + $0x1c] sm:$0x1] %v1599
      %v1601 = vld [vmem:[%s1570 + $0x20] sm:$0xf]
      %v1602 = vsel %vm1573, %v1528, %v1601
      %1603 = vst [vmem:[%s1570 + $0x20] sm:$0xf] %v1602
      %v1604 = vld [vmem:[%s1570 + $0x24] sm:$0x1]
      %v1605 = vsel %vm1579, %v1529, %v1604
      %1606 = vst [vmem:[%s1570 + $0x24] sm:$0x1] %v1605
      %v1607 = vld [vmem:[%s1570 + $0x28] sm:$0xf]
      %v1608 = vsel %vm1573, %v1536, %v1607
      %1609 = vst [vmem:[%s1570 + $0x28] sm:$0xf] %v1608
      %v1610 = vld [vmem:[%s1570 + $0x2c] sm:$0x1]
      %v1611 = vsel %vm1579, %v1537, %v1610
      %1612 = vst [vmem:[%s1570 + $0x2c] sm:$0x1] %v1611
      %v1613 = vld [vmem:[%s1570 + $0x30] sm:$0xf]
      %v1614 = vsel %vm1573, %v1544, %v1613
      %1615 = vst [vmem:[%s1570 + $0x30] sm:$0xf] %v1614
      %v1616 = vld [vmem:[%s1570 + $0x34] sm:$0x1]
      %v1617 = vsel %vm1579, %v1545, %v1616
      %1618 = vst [vmem:[%s1570 + $0x34] sm:$0x1] %v1617
      %v1619 = vld [vmem:[%s1570 + $0x38] sm:$0xf]
      %v1620 = vsel %vm1573, %v1552, %v1619
      %1621 = vst [vmem:[%s1570 + $0x38] sm:$0xf] %v1620
      %v1622 = vld [vmem:[%s1570 + $0x3c] sm:$0x1]
      %v1623 = vsel %vm1579, %v1553, %v1622
      %1624 = vst [vmem:[%s1570 + $0x3c] sm:$0x1] %v1623
      %v1625 = vld [vmem:[#allocation2] sm:$0xf]
      %v1626 = vld [vmem:[#allocation2 + $0x8] sm:$0xf]
      %v1627 = vld [vmem:[#allocation2 + $0x10] sm:$0xf]
      %v1628 = vld [vmem:[#allocation2 + $0x18] sm:$0xf]
      %v1629 = vld [vmem:[#allocation2 + $0x20] sm:$0xf]
      %v1630 = vld [vmem:[#allocation2 + $0x28] sm:$0xf]
      %v1631 = vld [vmem:[#allocation2 + $0x30] sm:$0xf]
      %v1632 = vld [vmem:[#allocation2 + $0x38] sm:$0xf]
      %v1633 = vld [vmem:[%s4] sm:$0xf]
      %v1634 = vld [vmem:[#allocation2 + $0x4] sm:$0x1]
      %v1635 = vld [vmem:[#allocation2 + $0xc] sm:$0x1]
      %v1636 = vld [vmem:[#allocation2 + $0x14] sm:$0x1]
      %v1637 = vld [vmem:[#allocation2 + $0x1c] sm:$0x1]
      %v1638 = vld [vmem:[#allocation2 + $0x24] sm:$0x1]
      %v1639 = vld [vmem:[#allocation2 + $0x2c] sm:$0x1]
      %v1640 = vld [vmem:[#allocation2 + $0x34] sm:$0x1]
      %v1641 = vld [vmem:[#allocation2 + $0x3c] sm:$0x1]
      %v1643 = vshrl.u32 %v1625, 16
      %v1645 = vrot.slane %v1643, 4
      %v1646 = vshll.u32 %v1625, 16
      %v1648 = vrot.slane %v1646, 5
      %v1649 = vor.u32 %v1645, %v1648
      %v1650 = vrot.slane %v1649, 4
      %v1652 = vshll.u32 %v1634, 16
      %v1654 = vrot.slane %v1652, 5
      %v1655 = vsel %vm529, %v1650, %v1654
      %v1657 = vshrl.u32 %v1626, 16
      %v1659 = vrot.slane %v1657, 4
      %v1660 = vshll.u32 %v1626, 16
      %v1662 = vrot.slane %v1660, 5
      %v1663 = vor.u32 %v1659, %v1662
      %v1664 = vrot.slane %v1663, 4
      %v1666 = vshll.u32 %v1635, 16
      %v1668 = vrot.slane %v1666, 5
      %v1669 = vsel %vm529, %v1664, %v1668
      %v1671 = vshrl.u32 %v1627, 16
      %v1673 = vrot.slane %v1671, 4
      %v1674 = vshll.u32 %v1627, 16
      %v1676 = vrot.slane %v1674, 5
      %v1677 = vor.u32 %v1673, %v1676
      %v1678 = vrot.slane %v1677, 4
      %v1680 = vshll.u32 %v1636, 16
      %v1682 = vrot.slane %v1680, 5
      %v1683 = vsel %vm529, %v1678, %v1682
      %v1685 = vshrl.u32 %v1628, 16
      %v1687 = vrot.slane %v1685, 4
      %v1688 = vshll.u32 %v1628, 16
      %v1690 = vrot.slane %v1688, 5
      %v1691 = vor.u32 %v1687, %v1690
      %v1692 = vrot.slane %v1691, 4
      %v1694 = vshll.u32 %v1637, 16
      %v1696 = vrot.slane %v1694, 5
      %v1697 = vsel %vm529, %v1692, %v1696
      %v1699 = vshrl.u32 %v1629, 16
      %v1701 = vrot.slane %v1699, 4
      %v1702 = vshll.u32 %v1629, 16
      %v1704 = vrot.slane %v1702, 5
      %v1705 = vor.u32 %v1701, %v1704
      %v1706 = vrot.slane %v1705, 4
      %v1708 = vshll.u32 %v1638, 16
      %v1710 = vrot.slane %v1708, 5
      %v1711 = vsel %vm529, %v1706, %v1710
      %v1713 = vshrl.u32 %v1630, 16
      %v1715 = vrot.slane %v1713, 4
      %v1716 = vshll.u32 %v1630, 16
      %v1718 = vrot.slane %v1716, 5
      %v1719 = vor.u32 %v1715, %v1718
      %v1720 = vrot.slane %v1719, 4
      %v1722 = vshll.u32 %v1639, 16
      %v1724 = vrot.slane %v1722, 5
      %v1725 = vsel %vm529, %v1720, %v1724
      %v1727 = vshrl.u32 %v1631, 16
      %v1729 = vrot.slane %v1727, 4
      %v1730 = vshll.u32 %v1631, 16
      %v1732 = vrot.slane %v1730, 5
      %v1733 = vor.u32 %v1729, %v1732
      %v1734 = vrot.slane %v1733, 4
      %v1736 = vshll.u32 %v1640, 16
      %v1738 = vrot.slane %v1736, 5
      %v1739 = vsel %vm529, %v1734, %v1738
      %v1741 = vshrl.u32 %v1632, 16
      %v1743 = vrot.slane %v1741, 4
      %v1744 = vshll.u32 %v1632, 16
      %v1746 = vrot.slane %v1744, 5
      %v1747 = vor.u32 %v1743, %v1746
      %v1748 = vrot.slane %v1747, 4
      %v1750 = vshll.u32 %v1641, 16
      %v1752 = vrot.slane %v1750, 5
      %v1753 = vsel %vm529, %v1748, %v1752
      %s1754 = scalar_lea.vmem %s4, 4
      %v1755 = vld [vmem:[%s1754] sm:$0xf]
      %v1756 = vunpack.c.l.b16 %v1655
      %v1757 = vunpack.c.l.b16 %v1669
      %v1758 = vunpack.c.l.b16 %v1683
      %v1759 = vunpack.c.l.b16 %v1697
      %v1760 = vunpack.c.l.b16 %v1711
      %v1761 = vunpack.c.l.b16 %v1725
      %v1762 = vunpack.c.l.b16 %v1739
      %v1763 = vunpack.c.l.b16 %v1753
      %v1764 = vpack.c.b16 %v1757, %v1756
      %v1765 = vpack.c.b16 %v1759, %v1758
      %v1766 = vpack.c.b16 %v1761, %v1760
      %v1767 = vpack.c.b16 %v1763, %v1762
      %vm1768 = vcmask 64512
      %v1770 = vsel %vm1768, %v1764, 0
      %v1773 = vsel %vm1768, %v1765, 0
      %v1776 = vsel %vm1768, %v1766, 0
      %v1779 = vsel %vm1768, %v1767, 0
      %vm1781 = vcmask 1043456
      %v1783 = vsel %vm1781, %v1755, 0
      %1785 = vmatpush.bf16.msra.mxu0 0
      %1786 = vmatpush.bf16.msra.mxu0 0
      %1787 = vmatpush.bf16.msra.mxu0 0
      %1788 = vmatpush.bf16.msra.mxu0 0
      %1789 = vmatpush.bf16.msra.mxu0 0
      %1790 = vmatpush.bf16.msra.mxu0 0
      %1791 = vmatpush.bf16.msra.mxu0 0
      %1792 = vmatpush.bf16.msra.mxu0 %v1783
      %1793 = vmatmul.bf16.gmra.mxu0 %v1770
      %v1794 = vpop.f32.mrf.mxu0
      %v1795 = vadd.f32 0.0, %v1794
      %v1796 = vpop.f32.mrf.mxu0
      %v1797 = vadd.f32 0.0, %v1796
      %1798 = vmatmul.bf16.gmra.mxu0 %v1773
      %v1799 = vpop.f32.mrf.mxu0
      %v1800 = vadd.f32 0.0, %v1799
      %v1801 = vpop.f32.mrf.mxu0
      %v1802 = vadd.f32 0.0, %v1801
      %1803 = vmatmul.bf16.gmra.mxu0 %v1776
      %v1804 = vpop.f32.mrf.mxu0
      %v1805 = vadd.f32 0.0, %v1804
      %v1806 = vpop.f32.mrf.mxu0
      %v1807 = vadd.f32 0.0, %v1806
      %1808 = vmatmul.bf16.gmra.mxu0 %v1779
      %v1809 = vpop.f32.mrf.mxu0
      %v1810 = vadd.f32 0.0, %v1809
      %v1811 = vpop.f32.mrf.mxu0
      %v1812 = vadd.f32 0.0, %v1811
      %1813 = vdwg.mxu0
      %v1822 = vunpack.c.l.b16 %v1625
      %v1823 = vunpack.c.l.b16 %v1626
      %v1824 = vunpack.c.l.b16 %v1627
      %v1825 = vunpack.c.l.b16 %v1628
      %v1826 = vunpack.c.l.b16 %v1629
      %v1827 = vunpack.c.l.b16 %v1630
      %v1828 = vunpack.c.l.b16 %v1631
      %v1829 = vunpack.c.l.b16 %v1632
      %v1830 = vpack.c.b16 %v1823, %v1822
      %v1831 = vpack.c.b16 %v1825, %v1824
      %v1832 = vpack.c.b16 %v1827, %v1826
      %v1833 = vpack.c.b16 %v1829, %v1828
      %v1835 = vsel %vm1768, %v1830, 0
      %v1838 = vsel %vm1768, %v1831, 0
      %v1841 = vsel %vm1768, %v1832, 0
      %v1844 = vsel %vm1768, %v1833, 0
      %v1847 = vsel %vm1781, %v1633, 0
      %1849 = vmatpush.bf16.msra.mxu0 0
      %1850 = vmatpush.bf16.msra.mxu0 0
      %1851 = vmatpush.bf16.msra.mxu0 0
      %1852 = vmatpush.bf16.msra.mxu0 0
      %1853 = vmatpush.bf16.msra.mxu0 0
      %1854 = vmatpush.bf16.msra.mxu0 0
      %1855 = vmatpush.bf16.msra.mxu0 0
      %1856 = vmatpush.bf16.msra.mxu0 %v1847
      %1857 = vmatmul.bf16.gmra.mxu0 %v1835
      %v1858 = vpop.f32.mrf.mxu0
      %v1859 = vadd.f32 %v1795, %v1858
      %v1860 = vpop.f32.mrf.mxu0
      %v1861 = vadd.f32 %v1797, %v1860
      %1862 = vmatmul.bf16.gmra.mxu0 %v1838
      %v1863 = vpop.f32.mrf.mxu0
      %v1864 = vadd.f32 %v1800, %v1863
      %v1865 = vpop.f32.mrf.mxu0
      %v1866 = vadd.f32 %v1802, %v1865
      %1867 = vmatmul.bf16.gmra.mxu0 %v1841
      %v1868 = vpop.f32.mrf.mxu0
      %v1869 = vadd.f32 %v1805, %v1868
      %v1870 = vpop.f32.mrf.mxu0
      %v1871 = vadd.f32 %v1807, %v1870
      %1872 = vmatmul.bf16.gmra.mxu0 %v1844
      %v1873 = vpop.f32.mrf.mxu0
      %v1874 = vadd.f32 %v1810, %v1873
      %v1875 = vpop.f32.mrf.mxu0
      %v1876 = vadd.f32 %v1812, %v1875
      %1877 = vdwg.mxu0
      %v1878 = vld [vmem:[#allocation2] sm:$0xe]
      %v1879 = vld [vmem:[#allocation2 + $0x8] sm:$0xe]
      %v1880 = vld [vmem:[#allocation2 + $0x10] sm:$0xe]
      %v1881 = vld [vmem:[#allocation2 + $0x18] sm:$0xe]
      %v1882 = vld [vmem:[#allocation2 + $0x20] sm:$0xe]
      %v1883 = vld [vmem:[#allocation2 + $0x28] sm:$0xe]
      %v1884 = vld [vmem:[#allocation2 + $0x30] sm:$0xe]
      %v1885 = vld [vmem:[#allocation2 + $0x38] sm:$0xe]
      %vm1902 = vcmask 1042432
      %vm1903 = vcmask 1046532
      %vm1904 = vmor %vm1902, %vm1903
      %v1905 = vrot.slane %v1878, 5
      %v1906 = vrot.slane %v1905, 4
      %v1907 = vrot.slane %v1634, 5
      %v1908 = vsel %vm1904, %v1906, %v1907
      %v1909 = vrot.slane %v1879, 5
      %v1910 = vrot.slane %v1909, 4
      %v1911 = vrot.slane %v1635, 5
      %v1912 = vsel %vm1904, %v1910, %v1911
      %v1913 = vrot.slane %v1880, 5
      %v1914 = vrot.slane %v1913, 4
      %v1915 = vrot.slane %v1636, 5
      %v1916 = vsel %vm1904, %v1914, %v1915
      %v1917 = vrot.slane %v1881, 5
      %v1918 = vrot.slane %v1917, 4
      %v1919 = vrot.slane %v1637, 5
      %v1920 = vsel %vm1904, %v1918, %v1919
      %v1921 = vrot.slane %v1882, 5
      %v1922 = vrot.slane %v1921, 4
      %v1923 = vrot.slane %v1638, 5
      %v1924 = vsel %vm1904, %v1922, %v1923
      %v1925 = vrot.slane %v1883, 5
      %v1926 = vrot.slane %v1925, 4
      %v1927 = vrot.slane %v1639, 5
      %v1928 = vsel %vm1904, %v1926, %v1927
      %v1929 = vrot.slane %v1884, 5
      %v1930 = vrot.slane %v1929, 4
      %v1931 = vrot.slane %v1640, 5
      %v1932 = vsel %vm1904, %v1930, %v1931
      %v1933 = vrot.slane %v1885, 5
      %v1934 = vrot.slane %v1933, 4
      %v1935 = vrot.slane %v1641, 5
      %v1936 = vsel %vm1904, %v1934, %v1935
      %s1937 = scalar_lea.vmem %s4, 8
      %v1938 = vld [vmem:[%s1937] sm:$0xf]
      %v1939 = vunpack.c.l.b16 %v1908
      %v1940 = vunpack.c.l.b16 %v1912
      %v1941 = vunpack.c.l.b16 %v1916
      %v1942 = vunpack.c.l.b16 %v1920
      %v1943 = vunpack.c.l.b16 %v1924
      %v1944 = vunpack.c.l.b16 %v1928
      %v1945 = vunpack.c.l.b16 %v1932
      %v1946 = vunpack.c.l.b16 %v1936
      %v1947 = vpack.c.b16 %v1940, %v1939
      %v1948 = vpack.c.b16 %v1942, %v1941
      %v1949 = vpack.c.b16 %v1944, %v1943
      %v1950 = vpack.c.b16 %v1946, %v1945
      %v1952 = vsel %vm1768, %v1947, 0
      %v1955 = vsel %vm1768, %v1948, 0
      %v1958 = vsel %vm1768, %v1949, 0
      %v1961 = vsel %vm1768, %v1950, 0
      %v1964 = vsel %vm1781, %v1938, 0
      %1966 = vmatpush.bf16.msra.mxu0 0
      %1967 = vmatpush.bf16.msra.mxu0 0
      %1968 = vmatpush.bf16.msra.mxu0 0
      %1969 = vmatpush.bf16.msra.mxu0 0
      %1970 = vmatpush.bf16.msra.mxu0 0
      %1971 = vmatpush.bf16.msra.mxu0 0
      %1972 = vmatpush.bf16.msra.mxu0 0
      %1973 = vmatpush.bf16.msra.mxu0 %v1964
      %1974 = vmatmul.bf16.gmra.mxu0 %v1952
      %v1975 = vpop.f32.mrf.mxu0
      %v1976 = vadd.f32 0.0, %v1975
      %v1977 = vpop.f32.mrf.mxu0
      %v1978 = vadd.f32 0.0, %v1977
      %1979 = vmatmul.bf16.gmra.mxu0 %v1955
      %v1980 = vpop.f32.mrf.mxu0
      %v1981 = vadd.f32 0.0, %v1980
      %v1982 = vpop.f32.mrf.mxu0
      %v1983 = vadd.f32 0.0, %v1982
      %1984 = vmatmul.bf16.gmra.mxu0 %v1958
      %v1985 = vpop.f32.mrf.mxu0
      %v1986 = vadd.f32 0.0, %v1985
      %v1987 = vpop.f32.mrf.mxu0
      %v1988 = vadd.f32 0.0, %v1987
      %1989 = vmatmul.bf16.gmra.mxu0 %v1961
      %v1990 = vpop.f32.mrf.mxu0
      %v1991 = vadd.f32 0.0, %v1990
      %v1992 = vpop.f32.mrf.mxu0
      %v1993 = vadd.f32 0.0, %v1992
      %1994 = vdwg.mxu0
      %v1995 = vadd.f32 %v1859, %v1976
      %v1996 = vadd.f32 %v1861, %v1978
      %v1997 = vadd.f32 %v1864, %v1981
      %v1998 = vadd.f32 %v1866, %v1983
      %v1999 = vadd.f32 %v1869, %v1986
      %v2000 = vadd.f32 %v1871, %v1988
      %v2001 = vadd.f32 %v1874, %v1991
      %v2002 = vadd.f32 %v1876, %v1993
      %v2003 = vld [vmem:[%s1570] sm:$0xf]
      %v2004 = vld [vmem:[%s1570 + $0x8] sm:$0xf]
      %v2005 = vld [vmem:[%s1570 + $0x10] sm:$0xf]
      %v2006 = vld [vmem:[%s1570 + $0x18] sm:$0xf]
      %v2007 = vld [vmem:[%s1570 + $0x20] sm:$0xf]
      %v2008 = vld [vmem:[%s1570 + $0x28] sm:$0xf]
      %v2009 = vld [vmem:[%s1570 + $0x30] sm:$0xf]
      %v2010 = vld [vmem:[%s1570 + $0x38] sm:$0xf]
      %s2011 = scalar_lea.vmem %s4, 12
      %v2012 = vld [vmem:[%s2011] sm:$0xf]
      %v2021 = vunpack.c.l.b16 %v2003
      %v2022 = vunpack.c.l.b16 %v2004
      %v2023 = vunpack.c.l.b16 %v2005
      %v2024 = vunpack.c.l.b16 %v2006
      %v2025 = vunpack.c.l.b16 %v2007
      %v2026 = vunpack.c.l.b16 %v2008
      %v2027 = vunpack.c.l.b16 %v2009
      %v2028 = vunpack.c.l.b16 %v2010
      %v2029 = vpack.c.b16 %v2022, %v2021
      %v2030 = vpack.c.b16 %v2024, %v2023
      %v2031 = vpack.c.b16 %v2026, %v2025
      %v2032 = vpack.c.b16 %v2028, %v2027
      %v2034 = vsel %vm1768, %v2029, 0
      %v2037 = vsel %vm1768, %v2030, 0
      %v2040 = vsel %vm1768, %v2031, 0
      %v2043 = vsel %vm1768, %v2032, 0
      %v2046 = vsel %vm1781, %v2012, 0
      %2048 = vmatpush.bf16.msra.mxu0 0
      %2049 = vmatpush.bf16.msra.mxu0 0
      %2050 = vmatpush.bf16.msra.mxu0 0
      %2051 = vmatpush.bf16.msra.mxu0 0
      %2052 = vmatpush.bf16.msra.mxu0 0
      %2053 = vmatpush.bf16.msra.mxu0 0
      %2054 = vmatpush.bf16.msra.mxu0 0
      %2055 = vmatpush.bf16.msra.mxu0 %v2046
      %2056 = vmatmul.bf16.gmra.mxu0 %v2034
      %v2057 = vpop.f32.mrf.mxu0
      %v2058 = vadd.f32 0.0, %v2057
      %v2059 = vpop.f32.mrf.mxu0
      %v2060 = vadd.f32 0.0, %v2059
      %2061 = vmatmul.bf16.gmra.mxu0 %v2037
      %v2062 = vpop.f32.mrf.mxu0
      %v2063 = vadd.f32 0.0, %v2062
      %v2064 = vpop.f32.mrf.mxu0
      %v2065 = vadd.f32 0.0, %v2064
      %2066 = vmatmul.bf16.gmra.mxu0 %v2040
      %v2067 = vpop.f32.mrf.mxu0
      %v2068 = vadd.f32 0.0, %v2067
      %v2069 = vpop.f32.mrf.mxu0
      %v2070 = vadd.f32 0.0, %v2069
      %2071 = vmatmul.bf16.gmra.mxu0 %v2043
      %v2072 = vpop.f32.mrf.mxu0
      %v2073 = vadd.f32 0.0, %v2072
      %v2074 = vpop.f32.mrf.mxu0
      %v2075 = vadd.f32 0.0, %v2074
      %2076 = vdwg.mxu0
      %v2077 = vadd.f32 %v1995, %v2058
      %v2078 = vadd.f32 %v1996, %v2060
      %v2079 = vadd.f32 %v1997, %v2063
      %v2080 = vadd.f32 %v1998, %v2065
      %v2081 = vadd.f32 %v1999, %v2068
      %v2082 = vadd.f32 %v2000, %v2070
      %v2083 = vadd.f32 %v2001, %v2073
      %v2084 = vadd.f32 %v2002, %v2075
      %v2085 = vld [vmem:[%s1570] sm:$0xf]
      %v2086 = vld [vmem:[%s1570 + $0x4] sm:$0x1]
      %v2087 = vld [vmem:[%s1570 + $0x8] sm:$0xf]
      %v2088 = vld [vmem:[%s1570 + $0xc] sm:$0x1]
      %v2089 = vld [vmem:[%s1570 + $0x10] sm:$0xf]
      %v2090 = vld [vmem:[%s1570 + $0x14] sm:$0x1]
      %v2091 = vld [vmem:[%s1570 + $0x18] sm:$0xf]
      %v2092 = vld [vmem:[%s1570 + $0x1c] sm:$0x1]
      %v2093 = vld [vmem:[%s1570 + $0x20] sm:$0xf]
      %v2094 = vld [vmem:[%s1570 + $0x24] sm:$0x1]
      %v2095 = vld [vmem:[%s1570 + $0x28] sm:$0xf]
      %v2096 = vld [vmem:[%s1570 + $0x2c] sm:$0x1]
      %v2097 = vld [vmem:[%s1570 + $0x30] sm:$0xf]
      %v2098 = vld [vmem:[%s1570 + $0x34] sm:$0x1]
      %v2099 = vld [vmem:[%s1570 + $0x38] sm:$0xf]
      %v2100 = vld [vmem:[%s1570 + $0x3c] sm:$0x1]
      %v2102 = vshrl.u32 %v2085, 16
      %v2104 = vrot.slane %v2102, 4
      %v2105 = vshll.u32 %v2085, 16
      %v2107 = vrot.slane %v2105, 5
      %v2108 = vor.u32 %v2104, %v2107
      %v2109 = vrot.slane %v2108, 4
      %v2111 = vshll.u32 %v2086, 16
      %v2113 = vrot.slane %v2111, 5
      %v2114 = vsel %vm529, %v2109, %v2113
      %v2116 = vshrl.u32 %v2087, 16
      %v2118 = vrot.slane %v2116, 4
      %v2119 = vshll.u32 %v2087, 16
      %v2121 = vrot.slane %v2119, 5
      %v2122 = vor.u32 %v2118, %v2121
      %v2123 = vrot.slane %v2122, 4
      %v2125 = vshll.u32 %v2088, 16
      %v2127 = vrot.slane %v2125, 5
      %v2128 = vsel %vm529, %v2123, %v2127
      %v2130 = vshrl.u32 %v2089, 16
      %v2132 = vrot.slane %v2130, 4
      %v2133 = vshll.u32 %v2089, 16
      %v2135 = vrot.slane %v2133, 5
      %v2136 = vor.u32 %v2132, %v2135
      %v2137 = vrot.slane %v2136, 4
      %v2139 = vshll.u32 %v2090, 16
      %v2141 = vrot.slane %v2139, 5
      %v2142 = vsel %vm529, %v2137, %v2141
      %v2144 = vshrl.u32 %v2091, 16
      %v2146 = vrot.slane %v2144, 4
      %v2147 = vshll.u32 %v2091, 16
      %v2149 = vrot.slane %v2147, 5
      %v2150 = vor.u32 %v2146, %v2149
      %v2151 = vrot.slane %v2150, 4
      %v2153 = vshll.u32 %v2092, 16
      %v2155 = vrot.slane %v2153, 5
      %v2156 = vsel %vm529, %v2151, %v2155
      %v2158 = vshrl.u32 %v2093, 16
      %v2160 = vrot.slane %v2158, 4
      %v2161 = vshll.u32 %v2093, 16
      %v2163 = vrot.slane %v2161, 5
      %v2164 = vor.u32 %v2160, %v2163
      %v2165 = vrot.slane %v2164, 4
      %v2167 = vshll.u32 %v2094, 16
      %v2169 = vrot.slane %v2167, 5
      %v2170 = vsel %vm529, %v2165, %v2169
      %v2172 = vshrl.u32 %v2095, 16
      %v2174 = vrot.slane %v2172, 4
      %v2175 = vshll.u32 %v2095, 16
      %v2177 = vrot.slane %v2175, 5
      %v2178 = vor.u32 %v2174, %v2177
      %v2179 = vrot.slane %v2178, 4
      %v2181 = vshll.u32 %v2096, 16
      %v2183 = vrot.slane %v2181, 5
      %v2184 = vsel %vm529, %v2179, %v2183
      %v2186 = vshrl.u32 %v2097, 16
      %v2188 = vrot.slane %v2186, 4
      %v2189 = vshll.u32 %v2097, 16
      %v2191 = vrot.slane %v2189, 5
      %v2192 = vor.u32 %v2188, %v2191
      %v2193 = vrot.slane %v2192, 4
      %v2195 = vshll.u32 %v2098, 16
      %v2197 = vrot.slane %v2195, 5
      %v2198 = vsel %vm529, %v2193, %v2197
      %v2200 = vshrl.u32 %v2099, 16
      %v2202 = vrot.slane %v2200, 4
      %v2203 = vshll.u32 %v2099, 16
      %v2205 = vrot.slane %v2203, 5
      %v2206 = vor.u32 %v2202, %v2205
      %v2207 = vrot.slane %v2206, 4
      %v2209 = vshll.u32 %v2100, 16
      %v2211 = vrot.slane %v2209, 5
      %v2212 = vsel %vm529, %v2207, %v2211
      %s2213 = scalar_lea.vmem %s4, 16
      %v2214 = vld [vmem:[%s2213] sm:$0xf]
      %v2215 = vunpack.c.l.b16 %v2114
      %v2216 = vunpack.c.l.b16 %v2128
      %v2217 = vunpack.c.l.b16 %v2142
      %v2218 = vunpack.c.l.b16 %v2156
      %v2219 = vunpack.c.l.b16 %v2170
      %v2220 = vunpack.c.l.b16 %v2184
      %v2221 = vunpack.c.l.b16 %v2198
      %v2222 = vunpack.c.l.b16 %v2212
      %v2223 = vpack.c.b16 %v2216, %v2215
      %v2224 = vpack.c.b16 %v2218, %v2217
      %v2225 = vpack.c.b16 %v2220, %v2219
      %v2226 = vpack.c.b16 %v2222, %v2221
      %v2228 = vsel %vm1768, %v2223, 0
      %v2231 = vsel %vm1768, %v2224, 0
      %v2234 = vsel %vm1768, %v2225, 0
      %v2237 = vsel %vm1768, %v2226, 0
      %v2240 = vsel %vm1781, %v2214, 0
      %2242 = vmatpush.bf16.msra.mxu0 0
      %2243 = vmatpush.bf16.msra.mxu0 0
      %2244 = vmatpush.bf16.msra.mxu0 0
      %2245 = vmatpush.bf16.msra.mxu0 0
      %2246 = vmatpush.bf16.msra.mxu0 0
      %2247 = vmatpush.bf16.msra.mxu0 0
      %2248 = vmatpush.bf16.msra.mxu0 0
      %2249 = vmatpush.bf16.msra.mxu0 %v2240
      %2250 = vmatmul.bf16.gmra.mxu0 %v2228
      %v2251 = vpop.f32.mrf.mxu0
      %v2252 = vadd.f32 0.0, %v2251
      %v2253 = vpop.f32.mrf.mxu0
      %v2254 = vadd.f32 0.0, %v2253
      %2255 = vmatmul.bf16.gmra.mxu0 %v2231
      %v2256 = vpop.f32.mrf.mxu0
      %v2257 = vadd.f32 0.0, %v2256
      %v2258 = vpop.f32.mrf.mxu0
      %v2259 = vadd.f32 0.0, %v2258
      %2260 = vmatmul.bf16.gmra.mxu0 %v2234
      %v2261 = vpop.f32.mrf.mxu0
      %v2262 = vadd.f32 0.0, %v2261
      %v2263 = vpop.f32.mrf.mxu0
      %v2264 = vadd.f32 0.0, %v2263
      %2265 = vmatmul.bf16.gmra.mxu0 %v2237
      %v2266 = vpop.f32.mrf.mxu0
      %v2267 = vadd.f32 0.0, %v2266
      %v2268 = vpop.f32.mrf.mxu0
      %v2269 = vadd.f32 0.0, %v2268
      %2270 = vdwg.mxu0
      %v2271 = vadd.f32 %v2077, %v2252
      %v2272 = vadd.f32 %v2078, %v2254
      %v2273 = vadd.f32 %v2079, %v2257
      %v2274 = vadd.f32 %v2080, %v2259
      %v2275 = vadd.f32 %v2081, %v2262
      %v2276 = vadd.f32 %v2082, %v2264
      %v2277 = vadd.f32 %v2083, %v2267
      %v2278 = vadd.f32 %v2084, %v2269
      %v2279 = vld [vmem:[%s1570] sm:$0xe]
      %v2280 = vld [vmem:[%s1570 + $0x8] sm:$0xe]
      %v2281 = vld [vmem:[%s1570 + $0x10] sm:$0xe]
      %v2282 = vld [vmem:[%s1570 + $0x18] sm:$0xe]
      %v2283 = vld [vmem:[%s1570 + $0x20] sm:$0xe]
      %v2284 = vld [vmem:[%s1570 + $0x28] sm:$0xe]
      %v2285 = vld [vmem:[%s1570 + $0x30] sm:$0xe]
      %v2286 = vld [vmem:[%s1570 + $0x38] sm:$0xe]
      %v2303 = vrot.slane %v2279, 5
      %v2304 = vrot.slane %v2303, 4
      %v2305 = vrot.slane %v2086, 5
      %v2306 = vsel %vm1904, %v2304, %v2305
      %v2307 = vrot.slane %v2280, 5
      %v2308 = vrot.slane %v2307, 4
      %v2309 = vrot.slane %v2088, 5
      %v2310 = vsel %vm1904, %v2308, %v2309
      %v2311 = vrot.slane %v2281, 5
      %v2312 = vrot.slane %v2311, 4
      %v2313 = vrot.slane %v2090, 5
      %v2314 = vsel %vm1904, %v2312, %v2313
      %v2315 = vrot.slane %v2282, 5
      %v2316 = vrot.slane %v2315, 4
      %v2317 = vrot.slane %v2092, 5
      %v2318 = vsel %vm1904, %v2316, %v2317
      %v2319 = vrot.slane %v2283, 5
      %v2320 = vrot.slane %v2319, 4
      %v2321 = vrot.slane %v2094, 5
      %v2322 = vsel %vm1904, %v2320, %v2321
      %v2323 = vrot.slane %v2284, 5
      %v2324 = vrot.slane %v2323, 4
      %v2325 = vrot.slane %v2096, 5
      %v2326 = vsel %vm1904, %v2324, %v2325
      %v2327 = vrot.slane %v2285, 5
      %v2328 = vrot.slane %v2327, 4
      %v2329 = vrot.slane %v2098, 5
      %v2330 = vsel %vm1904, %v2328, %v2329
      %v2331 = vrot.slane %v2286, 5
      %v2332 = vrot.slane %v2331, 4
      %v2333 = vrot.slane %v2100, 5
      %v2334 = vsel %vm1904, %v2332, %v2333
      %s2335 = scalar_lea.vmem %s4, 20
      %v2336 = vld [vmem:[%s2335] sm:$0xf]
      %v2337 = vunpack.c.l.b16 %v2306
      %v2338 = vunpack.c.l.b16 %v2310
      %v2339 = vunpack.c.l.b16 %v2314
      %v2340 = vunpack.c.l.b16 %v2318
      %v2341 = vunpack.c.l.b16 %v2322
      %v2342 = vunpack.c.l.b16 %v2326
      %v2343 = vunpack.c.l.b16 %v2330
      %v2344 = vunpack.c.l.b16 %v2334
      %v2345 = vpack.c.b16 %v2338, %v2337
      %v2346 = vpack.c.b16 %v2340, %v2339
      %v2347 = vpack.c.b16 %v2342, %v2341
      %v2348 = vpack.c.b16 %v2344, %v2343
      %v2350 = vsel %vm1768, %v2345, 0
      %v2353 = vsel %vm1768, %v2346, 0
      %v2356 = vsel %vm1768, %v2347, 0
      %v2359 = vsel %vm1768, %v2348, 0
      %v2362 = vsel %vm1781, %v2336, 0
      %2364 = vmatpush.bf16.msra.mxu0 0
      %2365 = vmatpush.bf16.msra.mxu0 0
      %2366 = vmatpush.bf16.msra.mxu0 0
      %2367 = vmatpush.bf16.msra.mxu0 0
      %2368 = vmatpush.bf16.msra.mxu0 0
      %2369 = vmatpush.bf16.msra.mxu0 0
      %2370 = vmatpush.bf16.msra.mxu0 0
      %2371 = vmatpush.bf16.msra.mxu0 %v2362
      %2372 = vmatmul.bf16.gmra.mxu0 %v2350
      %v2373 = vpop.f32.mrf.mxu0
      %v2374 = vadd.f32 0.0, %v2373
      %v2375 = vpop.f32.mrf.mxu0
      %v2376 = vadd.f32 0.0, %v2375
      %2377 = vmatmul.bf16.gmra.mxu0 %v2353
      %v2378 = vpop.f32.mrf.mxu0
      %v2379 = vadd.f32 0.0, %v2378
      %v2380 = vpop.f32.mrf.mxu0
      %v2381 = vadd.f32 0.0, %v2380
      %2382 = vmatmul.bf16.gmra.mxu0 %v2356
      %v2383 = vpop.f32.mrf.mxu0
      %v2384 = vadd.f32 0.0, %v2383
      %v2385 = vpop.f32.mrf.mxu0
      %v2386 = vadd.f32 0.0, %v2385
      %2387 = vmatmul.bf16.gmra.mxu0 %v2359
      %v2388 = vpop.f32.mrf.mxu0
      %v2389 = vadd.f32 0.0, %v2388
      %v2390 = vpop.f32.mrf.mxu0
      %v2391 = vadd.f32 0.0, %v2390
      %2392 = vdwg.mxu0
      %v2393 = vadd.f32 %v2271, %v2374
      %v2394 = vadd.f32 %v2272, %v2376
      %v2395 = vadd.f32 %v2273, %v2379
      %v2396 = vadd.f32 %v2274, %v2381
      %v2397 = vadd.f32 %v2275, %v2384
      %v2398 = vadd.f32 %v2276, %v2386
      %v2399 = vadd.f32 %v2277, %v2389
      %v2400 = vadd.f32 %v2278, %v2391
      %s2401 = scalar_lea.vmem [#allocation2], 16
      %v2402 = vld [vmem:[%s2401] sm:$0xf]
      %v2403 = vld [vmem:[%s2401 + $0x8] sm:$0xf]
      %v2404 = vld [vmem:[%s2401 + $0x10] sm:$0xf]
      %v2405 = vld [vmem:[%s2401 + $0x18] sm:$0xf]
      %v2406 = vld [vmem:[%s2401 + $0x20] sm:$0xf]
      %v2407 = vld [vmem:[%s2401 + $0x28] sm:$0xf]
      %v2408 = vld [vmem:[%s2401 + $0x30] sm:$0xf]
      %v2409 = vld [vmem:[%s2401 + $0x38] sm:$0xf]
      %s2410 = scalar_lea.vmem %s4, 24
      %v2411 = vld [vmem:[%s2410] sm:$0xf]
      %v2420 = vunpack.c.l.b16 %v2402
      %v2421 = vunpack.c.l.b16 %v2403
      %v2422 = vunpack.c.l.b16 %v2404
      %v2423 = vunpack.c.l.b16 %v2405
      %v2424 = vunpack.c.l.b16 %v2406
      %v2425 = vunpack.c.l.b16 %v2407
      %v2426 = vunpack.c.l.b16 %v2408
      %v2427 = vunpack.c.l.b16 %v2409
      %v2428 = vpack.c.b16 %v2421, %v2420
      %v2429 = vpack.c.b16 %v2423, %v2422
      %v2430 = vpack.c.b16 %v2425, %v2424
      %v2431 = vpack.c.b16 %v2427, %v2426
      %v2433 = vsel %vm1768, %v2428, 0
      %v2436 = vsel %vm1768, %v2429, 0
      %v2439 = vsel %vm1768, %v2430, 0
      %v2442 = vsel %vm1768, %v2431, 0
      %v2445 = vsel %vm1781, %v2411, 0
      %2447 = vmatpush.bf16.msra.mxu0 0
      %2448 = vmatpush.bf16.msra.mxu0 0
      %2449 = vmatpush.bf16.msra.mxu0 0
      %2450 = vmatpush.bf16.msra.mxu0 0
      %2451 = vmatpush.bf16.msra.mxu0 0
      %2452 = vmatpush.bf16.msra.mxu0 0
      %2453 = vmatpush.bf16.msra.mxu0 0
      %2454 = vmatpush.bf16.msra.mxu0 %v2445
      %2455 = vmatmul.bf16.gmra.mxu0 %v2433
      %v2456 = vpop.f32.mrf.mxu0
      %v2457 = vadd.f32 0.0, %v2456
      %v2458 = vpop.f32.mrf.mxu0
      %v2459 = vadd.f32 0.0, %v2458
      %2460 = vmatmul.bf16.gmra.mxu0 %v2436
      %v2461 = vpop.f32.mrf.mxu0
      %v2462 = vadd.f32 0.0, %v2461
      %v2463 = vpop.f32.mrf.mxu0
      %v2464 = vadd.f32 0.0, %v2463
      %2465 = vmatmul.bf16.gmra.mxu0 %v2439
      %v2466 = vpop.f32.mrf.mxu0
      %v2467 = vadd.f32 0.0, %v2466
      %v2468 = vpop.f32.mrf.mxu0
      %v2469 = vadd.f32 0.0, %v2468
      %2470 = vmatmul.bf16.gmra.mxu0 %v2442
      %v2471 = vpop.f32.mrf.mxu0
      %v2472 = vadd.f32 0.0, %v2471
      %v2473 = vpop.f32.mrf.mxu0
      %v2474 = vadd.f32 0.0, %v2473
      %2475 = vdwg.mxu0
      %v2476 = vadd.f32 %v2393, %v2457
      %v2477 = vadd.f32 %v2394, %v2459
      %v2478 = vadd.f32 %v2395, %v2462
      %v2479 = vadd.f32 %v2396, %v2464
      %v2480 = vadd.f32 %v2397, %v2467
      %v2481 = vadd.f32 %v2398, %v2469
      %v2482 = vadd.f32 %v2399, %v2472
      %v2483 = vadd.f32 %v2400, %v2474
      %v2484 = vld [vmem:[%s2401] sm:$0xf]
      %v2485 = vld [vmem:[%s2401 + $0x4] sm:$0x1]
      %v2486 = vld [vmem:[%s2401 + $0x8] sm:$0xf]
      %v2487 = vld [vmem:[%s2401 + $0xc] sm:$0x1]
      %v2488 = vld [vmem:[%s2401 + $0x10] sm:$0xf]
      %v2489 = vld [vmem:[%s2401 + $0x14] sm:$0x1]
      %v2490 = vld [vmem:[%s2401 + $0x18] sm:$0xf]
      %v2491 = vld [vmem:[%s2401 + $0x1c] sm:$0x1]
      %v2492 = vld [vmem:[%s2401 + $0x20] sm:$0xf]
      %v2493 = vld [vmem:[%s2401 + $0x24] sm:$0x1]
      %v2494 = vld [vmem:[%s2401 + $0x28] sm:$0xf]
      %v2495 = vld [vmem:[%s2401 + $0x2c] sm:$0x1]
      %v2496 = vld [vmem:[%s2401 + $0x30] sm:$0xf]
      %v2497 = vld [vmem:[%s2401 + $0x34] sm:$0x1]
      %v2498 = vld [vmem:[%s2401 + $0x38] sm:$0xf]
      %v2499 = vld [vmem:[%s2401 + $0x3c] sm:$0x1]
      %v2501 = vshrl.u32 %v2484, 16
      %v2503 = vrot.slane %v2501, 4
      %v2504 = vshll.u32 %v2484, 16
      %v2506 = vrot.slane %v2504, 5
      %v2507 = vor.u32 %v2503, %v2506
      %v2508 = vrot.slane %v2507, 4
      %v2510 = vshll.u32 %v2485, 16
      %v2512 = vrot.slane %v2510, 5
      %v2513 = vsel %vm529, %v2508, %v2512
      %v2515 = vshrl.u32 %v2486, 16
      %v2517 = vrot.slane %v2515, 4
      %v2518 = vshll.u32 %v2486, 16
      %v2520 = vrot.slane %v2518, 5
      %v2521 = vor.u32 %v2517, %v2520
      %v2522 = vrot.slane %v2521, 4
      %v2524 = vshll.u32 %v2487, 16
      %v2526 = vrot.slane %v2524, 5
      %v2527 = vsel %vm529, %v2522, %v2526
      %v2529 = vshrl.u32 %v2488, 16
      %v2531 = vrot.slane %v2529, 4
      %v2532 = vshll.u32 %v2488, 16
      %v2534 = vrot.slane %v2532, 5
      %v2535 = vor.u32 %v2531, %v2534
      %v2536 = vrot.slane %v2535, 4
      %v2538 = vshll.u32 %v2489, 16
      %v2540 = vrot.slane %v2538, 5
      %v2541 = vsel %vm529, %v2536, %v2540
      %v2543 = vshrl.u32 %v2490, 16
      %v2545 = vrot.slane %v2543, 4
      %v2546 = vshll.u32 %v2490, 16
      %v2548 = vrot.slane %v2546, 5
      %v2549 = vor.u32 %v2545, %v2548
      %v2550 = vrot.slane %v2549, 4
      %v2552 = vshll.u32 %v2491, 16
      %v2554 = vrot.slane %v2552, 5
      %v2555 = vsel %vm529, %v2550, %v2554
      %v2557 = vshrl.u32 %v2492, 16
      %v2559 = vrot.slane %v2557, 4
      %v2560 = vshll.u32 %v2492, 16
      %v2562 = vrot.slane %v2560, 5
      %v2563 = vor.u32 %v2559, %v2562
      %v2564 = vrot.slane %v2563, 4
      %v2566 = vshll.u32 %v2493, 16
      %v2568 = vrot.slane %v2566, 5
      %v2569 = vsel %vm529, %v2564, %v2568
      %v2571 = vshrl.u32 %v2494, 16
      %v2573 = vrot.slane %v2571, 4
      %v2574 = vshll.u32 %v2494, 16
      %v2576 = vrot.slane %v2574, 5
      %v2577 = vor.u32 %v2573, %v2576
      %v2578 = vrot.slane %v2577, 4
      %v2580 = vshll.u32 %v2495, 16
      %v2582 = vrot.slane %v2580, 5
      %v2583 = vsel %vm529, %v2578, %v2582
      %v2585 = vshrl.u32 %v2496, 16
      %v2587 = vrot.slane %v2585, 4
      %v2588 = vshll.u32 %v2496, 16
      %v2590 = vrot.slane %v2588, 5
      %v2591 = vor.u32 %v2587, %v2590
      %v2592 = vrot.slane %v2591, 4
      %v2594 = vshll.u32 %v2497, 16
      %v2596 = vrot.slane %v2594, 5
      %v2597 = vsel %vm529, %v2592, %v2596
      %v2599 = vshrl.u32 %v2498, 16
      %v2601 = vrot.slane %v2599, 4
      %v2602 = vshll.u32 %v2498, 16
      %v2604 = vrot.slane %v2602, 5
      %v2605 = vor.u32 %v2601, %v2604
      %v2606 = vrot.slane %v2605, 4
      %v2608 = vshll.u32 %v2499, 16
      %v2610 = vrot.slane %v2608, 5
      %v2611 = vsel %vm529, %v2606, %v2610
      %s2612 = scalar_lea.vmem %s4, 28
      %v2613 = vld [vmem:[%s2612] sm:$0xf]
      %v2614 = vunpack.c.l.b16 %v2513
      %v2615 = vunpack.c.l.b16 %v2527
      %v2616 = vunpack.c.l.b16 %v2541
      %v2617 = vunpack.c.l.b16 %v2555
      %v2618 = vunpack.c.l.b16 %v2569
      %v2619 = vunpack.c.l.b16 %v2583
      %v2620 = vunpack.c.l.b16 %v2597
      %v2621 = vunpack.c.l.b16 %v2611
      %v2622 = vpack.c.b16 %v2615, %v2614
      %v2623 = vpack.c.b16 %v2617, %v2616
      %v2624 = vpack.c.b16 %v2619, %v2618
      %v2625 = vpack.c.b16 %v2621, %v2620
      %v2627 = vsel %vm1768, %v2622, 0
      %v2630 = vsel %vm1768, %v2623, 0
      %v2633 = vsel %vm1768, %v2624, 0
      %v2636 = vsel %vm1768, %v2625, 0
      %v2639 = vsel %vm1781, %v2613, 0
      %2641 = vmatpush.bf16.msra.mxu0 0
      %2642 = vmatpush.bf16.msra.mxu0 0
      %2643 = vmatpush.bf16.msra.mxu0 0
      %2644 = vmatpush.bf16.msra.mxu0 0
      %2645 = vmatpush.bf16.msra.mxu0 0
      %2646 = vmatpush.bf16.msra.mxu0 0
      %2647 = vmatpush.bf16.msra.mxu0 0
      %2648 = vmatpush.bf16.msra.mxu0 %v2639
      %2649 = vmatmul.bf16.gmra.mxu0 %v2627
      %v2650 = vpop.f32.mrf.mxu0
      %v2651 = vadd.f32 0.0, %v2650
      %v2652 = vpop.f32.mrf.mxu0
      %v2653 = vadd.f32 0.0, %v2652
      %2654 = vmatmul.bf16.gmra.mxu0 %v2630
      %v2655 = vpop.f32.mrf.mxu0
      %v2656 = vadd.f32 0.0, %v2655
      %v2657 = vpop.f32.mrf.mxu0
      %v2658 = vadd.f32 0.0, %v2657
      %2659 = vmatmul.bf16.gmra.mxu0 %v2633
      %v2660 = vpop.f32.mrf.mxu0
      %v2661 = vadd.f32 0.0, %v2660
      %v2662 = vpop.f32.mrf.mxu0
      %v2663 = vadd.f32 0.0, %v2662
      %2664 = vmatmul.bf16.gmra.mxu0 %v2636
      %v2665 = vpop.f32.mrf.mxu0
      %v2666 = vadd.f32 0.0, %v2665
      %v2667 = vpop.f32.mrf.mxu0
      %v2668 = vadd.f32 0.0, %v2667
      %2669 = vdwg.mxu0
      %v2670 = vadd.f32 %v2476, %v2651
      %v2671 = vadd.f32 %v2477, %v2653
      %v2672 = vadd.f32 %v2478, %v2656
      %v2673 = vadd.f32 %v2479, %v2658
      %v2674 = vadd.f32 %v2480, %v2661
      %v2675 = vadd.f32 %v2481, %v2663
      %v2676 = vadd.f32 %v2482, %v2666
      %v2677 = vadd.f32 %v2483, %v2668
      %v2678 = vld [vmem:[%s2401] sm:$0xe]
      %v2679 = vld [vmem:[%s2401 + $0x8] sm:$0xe]
      %v2680 = vld [vmem:[%s2401 + $0x10] sm:$0xe]
      %v2681 = vld [vmem:[%s2401 + $0x18] sm:$0xe]
      %v2682 = vld [vmem:[%s2401 + $0x20] sm:$0xe]
      %v2683 = vld [vmem:[%s2401 + $0x28] sm:$0xe]
      %v2684 = vld [vmem:[%s2401 + $0x30] sm:$0xe]
      %v2685 = vld [vmem:[%s2401 + $0x38] sm:$0xe]
      %v2702 = vrot.slane %v2678, 5
      %v2703 = vrot.slane %v2702, 4
      %v2704 = vrot.slane %v2485, 5
      %v2705 = vsel %vm1904, %v2703, %v2704
      %v2706 = vrot.slane %v2679, 5
      %v2707 = vrot.slane %v2706, 4
      %v2708 = vrot.slane %v2487, 5
      %v2709 = vsel %vm1904, %v2707, %v2708
      %v2710 = vrot.slane %v2680, 5
      %v2711 = vrot.slane %v2710, 4
      %v2712 = vrot.slane %v2489, 5
      %v2713 = vsel %vm1904, %v2711, %v2712
      %v2714 = vrot.slane %v2681, 5
      %v2715 = vrot.slane %v2714, 4
      %v2716 = vrot.slane %v2491, 5
      %v2717 = vsel %vm1904, %v2715, %v2716
      %v2718 = vrot.slane %v2682, 5
      %v2719 = vrot.slane %v2718, 4
      %v2720 = vrot.slane %v2493, 5
      %v2721 = vsel %vm1904, %v2719, %v2720
      %v2722 = vrot.slane %v2683, 5
      %v2723 = vrot.slane %v2722, 4
      %v2724 = vrot.slane %v2495, 5
      %v2725 = vsel %vm1904, %v2723, %v2724
      %v2726 = vrot.slane %v2684, 5
      %v2727 = vrot.slane %v2726, 4
      %v2728 = vrot.slane %v2497, 5
      %v2729 = vsel %vm1904, %v2727, %v2728
      %v2730 = vrot.slane %v2685, 5
      %v2731 = vrot.slane %v2730, 4
      %v2732 = vrot.slane %v2499, 5
      %v2733 = vsel %vm1904, %v2731, %v2732
      %s2734 = scalar_lea.vmem %s4, 32
      %v2735 = vld [vmem:[%s2734] sm:$0xf]
      %v2736 = vunpack.c.l.b16 %v2705
      %v2737 = vunpack.c.l.b16 %v2709
      %v2738 = vunpack.c.l.b16 %v2713
      %v2739 = vunpack.c.l.b16 %v2717
      %v2740 = vunpack.c.l.b16 %v2721
      %v2741 = vunpack.c.l.b16 %v2725
      %v2742 = vunpack.c.l.b16 %v2729
      %v2743 = vunpack.c.l.b16 %v2733
      %v2744 = vpack.c.b16 %v2737, %v2736
      %v2745 = vpack.c.b16 %v2739, %v2738
      %v2746 = vpack.c.b16 %v2741, %v2740
      %v2747 = vpack.c.b16 %v2743, %v2742
      %v2749 = vsel %vm1768, %v2744, 0
      %v2752 = vsel %vm1768, %v2745, 0
      %v2755 = vsel %vm1768, %v2746, 0
      %v2758 = vsel %vm1768, %v2747, 0
      %v2761 = vsel %vm1781, %v2735, 0
      %2763 = vmatpush.bf16.msra.mxu0 0
      %2764 = vmatpush.bf16.msra.mxu0 0
      %2765 = vmatpush.bf16.msra.mxu0 0
      %2766 = vmatpush.bf16.msra.mxu0 0
      %2767 = vmatpush.bf16.msra.mxu0 0
      %2768 = vmatpush.bf16.msra.mxu0 0
      %2769 = vmatpush.bf16.msra.mxu0 0
      %2770 = vmatpush.bf16.msra.mxu0 %v2761
      %2771 = vmatmul.bf16.gmra.mxu0 %v2749
      %v2772 = vpop.f32.mrf.mxu0
      %v2773 = vadd.f32 0.0, %v2772
      %v2774 = vpop.f32.mrf.mxu0
      %v2775 = vadd.f32 0.0, %v2774
      %2776 = vmatmul.bf16.gmra.mxu0 %v2752
      %v2777 = vpop.f32.mrf.mxu0
      %v2778 = vadd.f32 0.0, %v2777
      %v2779 = vpop.f32.mrf.mxu0
      %v2780 = vadd.f32 0.0, %v2779
      %2781 = vmatmul.bf16.gmra.mxu0 %v2755
      %v2782 = vpop.f32.mrf.mxu0
      %v2783 = vadd.f32 0.0, %v2782
      %v2784 = vpop.f32.mrf.mxu0
      %v2785 = vadd.f32 0.0, %v2784
      %2786 = vmatmul.bf16.gmra.mxu0 %v2758
      %v2787 = vpop.f32.mrf.mxu0
      %v2788 = vadd.f32 0.0, %v2787
      %v2789 = vpop.f32.mrf.mxu0
      %v2790 = vadd.f32 0.0, %v2789
      %2791 = vdwg.mxu0
      %v2792 = vadd.f32 %v2670, %v2773
      %v2793 = vadd.f32 %v2671, %v2775
      %v2794 = vadd.f32 %v2672, %v2778
      %v2795 = vadd.f32 %v2673, %v2780
      %v2796 = vadd.f32 %v2674, %v2783
      %v2797 = vadd.f32 %v2675, %v2785
      %v2798 = vadd.f32 %v2676, %v2788
      %v2799 = vadd.f32 %v2677, %v2790
      %v2800 = vld [vmem:[%s5] sm:$0x1]
      %v2802 = vperm.slane %v2800, 0
      %v2804 = vmul.f32 %v2792, %v2802
      %v2805 = vmul.f32 %v2793, %v2802
      %v2806 = vmul.f32 %v2794, %v2802
      %v2807 = vmul.f32 %v2795, %v2802
      %v2808 = vmul.f32 %v2796, %v2802
      %v2809 = vmul.f32 %v2797, %v2802
      %v2810 = vmul.f32 %v2798, %v2802
      %v2811 = vmul.f32 %v2799, %v2802
      %v2812 = vld [vmem:[%s6] sm:$0x1]
      %v2814 = vperm.slane %v2812, 0
      %v2816 = vadd.f32 %v2804, %v2814
      %v2817 = vadd.f32 %v2805, %v2814
      %v2818 = vadd.f32 %v2806, %v2814
      %v2819 = vadd.f32 %v2807, %v2814
      %v2820 = vadd.f32 %v2808, %v2814
      %v2821 = vadd.f32 %v2809, %v2814
      %v2822 = vadd.f32 %v2810, %v2814
      %v2823 = vadd.f32 %v2811, %v2814
      %v2824 = vld [vmem:[%s791] sm:$0xf]
      %v2825 = vld [vmem:[%s791 + $0x8] sm:$0xf]
      %v2826 = vld [vmem:[%s791 + $0x10] sm:$0xf]
      %v2827 = vld [vmem:[%s791 + $0x18] sm:$0xf]
      %v2828 = vld [vmem:[%s791 + $0x20] sm:$0xf]
      %v2829 = vld [vmem:[%s791 + $0x28] sm:$0xf]
      %v2830 = vld [vmem:[%s791 + $0x30] sm:$0xf]
      %v2831 = vld [vmem:[%s791 + $0x38] sm:$0xf]
      %v2832 = vld [vmem:[%s7] sm:$0x3]
      %v2841 = vunpack.c.l.b16 %v2824
      %v2842 = vunpack.c.l.b16 %v2825
      %v2843 = vunpack.c.l.b16 %v2826
      %v2844 = vunpack.c.l.b16 %v2827
      %v2845 = vunpack.c.l.b16 %v2828
      %v2846 = vunpack.c.l.b16 %v2829
      %v2847 = vunpack.c.l.b16 %v2830
      %v2848 = vunpack.c.l.b16 %v2831
      %v2849 = vpack.c.b16 %v2842, %v2841
      %v2850 = vpack.c.b16 %v2844, %v2843
      %v2851 = vpack.c.b16 %v2846, %v2845
      %v2852 = vpack.c.b16 %v2848, %v2847
      %v2854 = vsel %vm401, %v2849, 0
      %v2857 = vsel %vm401, %v2850, 0
      %v2860 = vsel %vm401, %v2851, 0
      %v2863 = vsel %vm401, %v2852, 0
      %v2866 = vsel %vm414, %v2832, 0
      %2868 = vmatpush.bf16.msra.mxu0 0
      %2869 = vmatpush.bf16.msra.mxu0 0
      %2870 = vmatpush.bf16.msra.mxu0 0
      %2871 = vmatpush.bf16.msra.mxu0 0
      %2872 = vmatpush.bf16.msra.mxu0 0
      %2873 = vmatpush.bf16.msra.mxu0 0
      %2874 = vmatpush.bf16.msra.mxu0 0
      %2875 = vmatpush.bf16.msra.mxu0 %v2866
      %2876 = vmatmul.bf16.gmra.mxu0 %v2854
      %v2877 = vpop.f32.mrf.mxu0
      %v2878 = vadd.f32 0.0, %v2877
      %v2879 = vpop.f32.mrf.mxu0
      %v2880 = vadd.f32 0.0, %v2879
      %2881 = vmatmul.bf16.gmra.mxu0 %v2857
      %v2882 = vpop.f32.mrf.mxu0
      %v2883 = vadd.f32 0.0, %v2882
      %v2884 = vpop.f32.mrf.mxu0
      %v2885 = vadd.f32 0.0, %v2884
      %2886 = vmatmul.bf16.gmra.mxu0 %v2860
      %v2887 = vpop.f32.mrf.mxu0
      %v2888 = vadd.f32 0.0, %v2887
      %v2889 = vpop.f32.mrf.mxu0
      %v2890 = vadd.f32 0.0, %v2889
      %2891 = vmatmul.bf16.gmra.mxu0 %v2863
      %v2892 = vpop.f32.mrf.mxu0
      %v2893 = vadd.f32 0.0, %v2892
      %v2894 = vpop.f32.mrf.mxu0
      %v2895 = vadd.f32 0.0, %v2894
      %2896 = vdwg.mxu0
      %v2897 = vld [vmem:[%s8] sm:$0x1]
      %v2899 = vperm.slane %v2897, 0
      %v2901 = vmul.f32 %v2878, %v2899
      %v2902 = vmul.f32 %v2880, %v2899
      %v2903 = vmul.f32 %v2883, %v2899
      %v2904 = vmul.f32 %v2885, %v2899
      %v2905 = vmul.f32 %v2888, %v2899
      %v2906 = vmul.f32 %v2890, %v2899
      %v2907 = vmul.f32 %v2893, %v2899
      %v2908 = vmul.f32 %v2895, %v2899
      %v2909 = vld [vmem:[%s9] sm:$0x1]
      %v2911 = vperm.slane %v2909, 0
      %v2913 = vadd.f32 %v2901, %v2911
      %v2914 = vadd.f32 %v2902, %v2911
      %v2915 = vadd.f32 %v2903, %v2911
      %v2916 = vadd.f32 %v2904, %v2911
      %v2917 = vadd.f32 %v2905, %v2911
      %v2918 = vadd.f32 %v2906, %v2911
      %v2919 = vadd.f32 %v2907, %v2911
      %v2920 = vadd.f32 %v2908, %v2911
      %v2921 = vadd.f32 %v2816, %v2913
      %v2922 = vadd.f32 %v2817, %v2914
      %v2923 = vadd.f32 %v2818, %v2915
      %v2924 = vadd.f32 %v2819, %v2916
      %v2925 = vadd.f32 %v2820, %v2917
      %v2926 = vadd.f32 %v2821, %v2918
      %v2927 = vadd.f32 %v2822, %v2919
      %v2928 = vadd.f32 %v2823, %v2920
      %v2929 = vmax.f32 %v2921, 0.0
      %v2930 = vmax.f32 %v2922, 0.0
      %v2931 = vmax.f32 %v2923, 0.0
      %v2932 = vmax.f32 %v2924, 0.0
      %v2933 = vmax.f32 %v2925, 0.0
      %v2934 = vmax.f32 %v2926, 0.0
      %v2935 = vmax.f32 %v2927, 0.0
      %v2936 = vmax.f32 %v2928, 0.0
      %2937 = vst.msk [vmem:[%s359] sm:$0xff] %vm1768, %v2929
      %2938 = vst.msk [vmem:[%s359 + $0x8] sm:$0xff] %vm1768, %v2930
      %2939 = vst.msk [vmem:[%s359 + $0x10] sm:$0xff] %vm1768, %v2931
      %2940 = vst.msk [vmem:[%s359 + $0x18] sm:$0xff] %vm1768, %v2932
      %2941 = vst.msk [vmem:[%s359 + $0x20] sm:$0xff] %vm1768, %v2933
      %2942 = vst.msk [vmem:[%s359 + $0x28] sm:$0xff] %vm1768, %v2934
      %2943 = vst.msk [vmem:[%s359 + $0x30] sm:$0xff] %vm1768, %v2935
      %2944 = vst.msk [vmem:[%s359 + $0x38] sm:$0xff] %vm1768, %v2936
      %p2945 = scmp.lt.s32.totalorder %s21, 1
      %s2946 = scalar_select %p2945, %s21, 1
      %s2947 = smul.addr %s2946, 8
      %s2948 = smul.addr %s2947, 8
      %s2949 = scalar_lea.vmem %s10, %s2948
      // Predicated region
      $region61: #{tpu_custom_call.1} parent=59 // pred_check
        %p2950 = pneg %p254
      $region62: #{tpu_custom_call.1} parent=59 // pred_check_branch
        %2952 = sbr.rel (%p2950) target = $region64
      $region63: #{tpu_custom_call.1} parent=59 // pred_region
        _
      $region64: #{tpu_custom_call.1} parent=59 // pred_fallthru
        _
    $region60: #{tpu_custom_call.1} parent=5 // pred_fallthru
      _
    %p2953 = scmp.le.s32.totalorder 2, %s16
    // Predicated region
    $region65: #{tpu_custom_call.1} parent=5 // pred_check
      %p2954 = pneg %p2953
    $region66: #{tpu_custom_call.1} parent=5 // pred_check_branch
      %2956 = sbr.rel (%p2954) target = $region68
    $region67: #{tpu_custom_call.1} parent=5 // pred_region
      %s2957 = ssub.s32 %s16, 2
      // Predicated region
      $region69: #{tpu_custom_call.1} parent=67 // pred_check
        %p2958 = pneg %p260
      $region70: #{tpu_custom_call.1} parent=67 // pred_check_branch
        %2960 = sbr.rel (%p2958) target = $region72
      $region71: #{tpu_custom_call.1} parent=67 // pred_region
        %p2961 = scmp.lt.s32.totalorder %s22, 1
        %s2962 = scalar_select %p2961, %s22, 1
        %s2963 = smul.addr %s2962, 8
        %s2964 = smul.addr %s2963, 8
        %s2965 = scalar_lea.vmem %s10, %s2964
      $region72: #{tpu_custom_call.1} parent=67 // pred_fallthru
        _
    $region68: #{tpu_custom_call.1} parent=5 // pred_fallthru
      _
  $region6: #{tpu_custom_call.1} parent=0 // loop_footer
    %s20 = sadd.s32 1, %s16
  $region7: #{tpu_custom_call.1} parent=0 // loop_footer_branch
    %15 = sbr.rel target = $region3
  $region8: #{tpu_custom_call.1} parent=0 // loop_exit
    _

</llo_original>
